<compile_context>
chip_gen: v5e
topology: v5e:2x2
jax: 0.10.0
libtpu: 0.0.40
codegen_flags: <defaults>
</compile_context>

<pallas_src>
import math
import functools

import jax
import jax.numpy as jnp
from jax.experimental import pallas as pl
from jax.experimental.pallas import tpu as pltpu


# ----------------------------------------------------------------------------
# Fused encoder-layer kernel.  One grid step == (batch element, query tile).
# ----------------------------------------------------------------------------

def _encoder_layer_kernel(x_tile_ref, x_full_ref, mask_ref,
                          ln1_g_ref, ln1_b_ref,
                          wq_ref, bq_ref, wkv_ref, bkv_ref,
                          wo_ref, bo_ref,
                          ln2_g_ref, ln2_b_ref,
                          w1_ref, b1_ref, w2_ref, b2_ref,
                          o_ref,
                          kv_ref,
                          *, num_heads, d_ff_tile):
    """x_tile_ref: [1, TQ, D]   x_full_ref: [1, L, D]   mask_ref: [1, 1, L]
    (mask value 1.0 == masked/pad key position).  kv_ref: [L, 2D] bf16 scratch
    holding K|V for the current batch element."""
    qt = pl.program_id(1)
    D = x_tile_ref.shape[-1]
    dk = D // num_heads
    d_ff = w1_ref.shape[1]

    def layer_norm(v, g_ref, b_ref):
        # f32 statistics (biased variance, eps=1e-5) == PyTorch nn.LayerNorm
        mu = jnp.mean(v, axis=-1, keepdims=True)
        vc = v - mu
        var = jnp.mean(vc * vc, axis=-1, keepdims=True)
        return vc * jax.lax.rsqrt(var + 1e-5) * g_ref[...] + b_ref[...]

    # ---- K/V for the whole sequence, computed once per batch element -------
    @pl.when(qt == 0)
    def _():
        xn_full = layer_norm(x_full_ref[0], ln1_g_ref, ln1_b_ref)      # [L, D]
        kv = jnp.dot(xn_full.astype(jnp.bfloat16), wkv_ref[...],
                     preferred_element_type=jnp.float32) + bkv_ref[...]  # [L, 2D]
        kv_ref[...] = kv.astype(jnp.bfloat16)

    # ---- LN1 + Q projection for this query tile -----------------------------
    x = x_tile_ref[0]                                                   # [TQ, D] f32
    xn = layer_norm(x, ln1_g_ref, ln1_b_ref)
    # wq/bq are pre-scaled by 1/sqrt(dk) in the wrapper.
    q = jnp.dot(xn.astype(jnp.bfloat16), wq_ref[...],
                preferred_element_type=jnp.float32) + bq_ref[...]       # [TQ, D]

    # ---- per-head attention, output projection fused into the loop ----------
    m_bool = mask_ref[0] > 0.5                        # [1, L]  (hoisted compare)
    neg = jnp.float32(-1000000000.0)
    attn_acc = jnp.zeros((x.shape[0], D), jnp.float32)
    for h in range(num_heads):
        q_h = q[:, h * dk:(h + 1) * dk].astype(jnp.bfloat16)            # [TQ, dk]
        k_h = kv_ref[:, h * dk:(h + 1) * dk]                            # [L, dk] bf16
        v_h = kv_ref[:, D + h * dk: D + (h + 1) * dk]                   # [L, dk] bf16
        # scores = q_h @ k_h^T (contract last dims), scale already folded in
        s = jax.lax.dot_general(q_h, k_h, (((1,), (1,)), ((), ())),
                                preferred_element_type=jnp.float32)     # [TQ, L]
        s = jnp.where(m_bool, neg, s)                 # masked_fill(-1e9), f32
        smax = jnp.max(s, axis=-1, keepdims=True)
        e = jnp.exp(s - smax)
        p = e * pl.reciprocal(jnp.sum(e, axis=-1, keepdims=True), approx=True)
        ctx_h = jnp.dot(p.astype(jnp.bfloat16), v_h,
                        preferred_element_type=jnp.float32)             # [TQ, dk]
        attn_acc = attn_acc + jnp.dot(ctx_h.astype(jnp.bfloat16),
                                      wo_ref[h * dk:(h + 1) * dk, :],
                                      preferred_element_type=jnp.float32)
    x1 = x + attn_acc + bo_ref[...]                   # residual (dropout == id)

    # ---- LN2 + FFN (reduction-tiled over d_ff) + residual --------------------
    xn2 = layer_norm(x1, ln2_g_ref, ln2_b_ref).astype(jnp.bfloat16)
    ffn_acc = jnp.zeros((x.shape[0], D), jnp.float32)
    for f0 in range(0, d_ff, d_ff_tile):
        f1 = min(f0 + d_ff_tile, d_ff)
        h1 = jnp.dot(xn2, w1_ref[:, f0:f1],
                     preferred_element_type=jnp.float32) + b1_ref[:, f0:f1]
        h1 = jnp.maximum(h1, 0.0).astype(jnp.bfloat16)                  # ReLU
        ffn_acc = ffn_acc + jnp.dot(h1, w2_ref[f0:f1, :],
                                    preferred_element_type=jnp.float32)
    o_ref[0] = (x1 + ffn_acc + b2_ref[...]).astype(o_ref.dtype)


# ----------------------------------------------------------------------------
# Wrapper
# ----------------------------------------------------------------------------

def encoder_layer(x, mask, params, num_heads, *, q_tile=128, ffn_tile=512):
    """x: [B, L, D] f32.  mask: [B, 1, L] bool (True == pad/masked key)."""
    B, L, D = x.shape
    d_ff = params['w1'].shape[1]
    dk = D // num_heads
    scale = 1.0 / math.sqrt(dk)

    TQ = q_tile if (L % q_tile == 0) else L          # query tile (full L if small)
    NQ = L // TQ
    FF = min(ffn_tile, d_ff)                         # in-kernel d_ff chunk

    # One-time wrapper-side casts: bf16 MXU operands, f32 biases / LN params.
    # 1/sqrt(dk) folded into the Q projection (weight + bias).
    wq = (params['wq'] * scale).astype(jnp.bfloat16)
    bq = (params['bq'] * scale).reshape(1, D).astype(jnp.float32)
    wkv = jnp.concatenate([params['wk'], params['wv']], axis=1).astype(jnp.bfloat16)
    bkv = jnp.concatenate([params['bk'], params['bv']]).reshape(1, 2 * D).astype(jnp.float32)
    wo = params['wo'].astype(jnp.bfloat16)
    bo = params['bo'].reshape(1, D).astype(jnp.float32)
    w1 = params['w1'].astype(jnp.bfloat16)
    b1 = params['b1'].reshape(1, d_ff).astype(jnp.float32)
    w2 = params['w2'].astype(jnp.bfloat16)
    b2 = params['b2'].reshape(1, D).astype(jnp.float32)
    mask_f = mask.reshape(B, 1, L).astype(jnp.float32)

    def full(shape):   # grid-invariant whole-array block (weights DMA'd once)
        return pl.BlockSpec(shape, lambda b, q, _n=len(shape): (0,) * _n)

    kernel = functools.partial(_encoder_layer_kernel,
                               num_heads=num_heads, d_ff_tile=FF)

    # Advisory cost estimate for XLA scheduling around the fused custom call.
    flops = B * (2 * L * D * (3 * D + D + 2 * d_ff) + 4 * L * L * D)
    transcendentals = B * num_heads * L * L + 4 * B * L
    bytes_accessed = (3 * B * L * D * 4 + B * L * 4
                      + (4 * D * D + 2 * D * d_ff) * 2
                      + (5 * D + 2 * D + d_ff + 4 * D) * 4)

    # Explicit scoped-VMEM budget with headroom (capped below v7x's 64 MiB).
    vmem_est = (2 * (TQ * D + L * D + TQ * D) * 4        # x tile/full + out (dbl-buf)
                + L * 2 * D * 2                          # K|V scratch (bf16)
                + (4 * D * D + 2 * D * d_ff) * 2         # resident bf16 weights
                + 4 * TQ * max(FF, D) * 4)               # live activation slack
    vmem_limit = int(min(max(2 * vmem_est, 8 * 1024 * 1024), 48 * 1024 * 1024))

    return pl.pallas_call(
        kernel,
        out_shape=jax.ShapeDtypeStruct((B, L, D), jnp.float32),
        grid=(B, NQ),
        in_specs=[
            pl.BlockSpec((1, TQ, D), lambda b, q: (b, q, 0)),   # x (query tile)
            pl.BlockSpec((1, L, D), lambda b, q: (b, 0, 0)),    # x (full, for K/V)
            pl.BlockSpec((1, 1, L), lambda b, q: (b, 0, 0)),    # key-pad mask
            full((1, D)), full((1, D)),                         # LN1 gamma/beta
            full((D, D)), full((1, D)),                         # WQ (pre-scaled) / bQ
            full((D, 2 * D)), full((1, 2 * D)),                 # fused WK|WV / bK|bV
            full((D, D)), full((1, D)),                         # output proj
            full((1, D)), full((1, D)),                         # LN2 gamma/beta
            full((D, d_ff)), full((1, d_ff)),                   # FFN fc1
            full((d_ff, D)), full((1, D)),                      # FFN fc2
        ],
        out_specs=pl.BlockSpec((1, TQ, D), lambda b, q: (b, q, 0)),
        scratch_shapes=[pltpu.VMEM((L, 2 * D), jnp.bfloat16)],  # K|V per batch elem
        compiler_params=pltpu.CompilerParams(
            dimension_semantics=("parallel", "arbitrary"),
            vmem_limit_bytes=vmem_limit),
        cost_estimate=pl.CostEstimate(flops=flops,
                                      transcendentals=transcendentals,
                                      bytes_accessed=bytes_accessed),
    )(x, x, mask_f,
      params['ln1_g'].reshape(1, D), params['ln1_b'].reshape(1, D),
      wq, bq, wkv, bkv, wo, bo,
      params['ln2_g'].reshape(1, D), params['ln2_b'].reshape(1, D),
      w1, b1, w2, b2)


# ----------------------------------------------------------------------------
# Pure-JAX reference (mirrors the PyTorch module).  matmul_dtype=jnp.bfloat16
# emulates the kernel's bf16 MXU operands (f32 accumulation) for tight checks.
# ----------------------------------------------------------------------------

def encoder_layer_ref(x, mask, p, num_heads,
                      matmul_dtype=jnp.float32, fold_q_scale=False):
    md = matmul_dtype

    def mm(a, b):
        return jnp.dot(a.astype(md), b.astype(md),
                       preferred_element_type=jnp.float32)

    def ln(v, g, b):
        mu = jnp.mean(v, -1, keepdims=True)
        var = jnp.mean((v - mu) ** 2, -1, keepdims=True)
        return (v - mu) / jnp.sqrt(var + 1e-5) * g + b

    B, L, D = x.shape
    dk = D // num_heads
    scale = 1.0 / math.sqrt(dk)
    wq, bq, post = ((p['wq'] * scale, p['bq'] * scale, 1.0) if fold_q_scale
                    else (p['wq'], p['bq'], scale))

    xn = ln(x, p['ln1_g'], p['ln1_b'])
    q = (mm(xn, wq) + bq).reshape(B, L, num_heads, dk).transpose(0, 2, 1, 3)
    k = (mm(xn, p['wk']) + p['bk']).reshape(B, L, num_heads, dk).transpose(0, 2, 1, 3)
    v = (mm(xn, p['wv']) + p['bv']).reshape(B, L, num_heads, dk).transpose(0, 2, 1, 3)
    s = jnp.einsum('bhqd,bhkd->bhqk', q.astype(md), k.astype(md),
                   preferred_element_type=jnp.float32) * post
    s = jnp.where(mask[:, None, :, :], -1000000000.0, s)   # mask.unsqueeze(1)
    a = jax.nn.softmax(s, axis=-1)
    ctx = jnp.einsum('bhqk,bhkd->bhqd', a.astype(md), v.astype(md),
                     preferred_element_type=jnp.float32
                     ).transpose(0, 2, 1, 3).reshape(B, L, D)
    x1 = x + (mm(ctx, p['wo']) + p['bo'])
    xn2 = ln(x1, p['ln2_g'], p['ln2_b'])
    h = jnp.maximum(mm(xn2, p['w1']) + p['b1'], 0.0)
    return x1 + (mm(h, p['w2']) + p['b2'])


# ----------------------------------------------------------------------------
# Deterministic parameter init (xavier-uniform weights, PyTorch-style biases)
# ----------------------------------------------------------------------------

def init_encoder_layer_params(key, d_model, d_ff):
    ks = jax.random.split(key, 12)

    def lin(kw, kb, fan_in, fan_out):
        lim = math.sqrt(6.0 / (fan_in + fan_out))
        w = jax.random.uniform(kw, (fan_in, fan_out), jnp.float32, -lim, lim)
        bl = 1.0 / math.sqrt(fan_in)
        b = jax.random.uniform(kb, (fan_out,), jnp.float32, -bl, bl)
        return w, b

    wq, bq = lin(ks[0], ks[1], d_model, d_model)
    wk, bk = lin(ks[2], ks[3], d_model, d_model)
    wv, bv = lin(ks[4], ks[5], d_model, d_model)
    wo, bo = lin(ks[6], ks[7], d_model, d_model)
    w1, b1 = lin(ks[8], ks[9], d_model, d_ff)
    w2, b2 = lin(ks[10], ks[11], d_ff, d_model)
    return dict(
        wq=wq, bq=bq, wk=wk, bk=bk, wv=wv, bv=bv, wo=wo, bo=bo,
        w1=w1, b1=b1, w2=w2, b2=b2,
        ln1_g=jnp.ones((d_model,), jnp.float32),
        ln1_b=jnp.zeros((d_model,), jnp.float32),
        ln2_g=jnp.ones((d_model,), jnp.float32),
        ln2_b=jnp.zeros((d_model,), jnp.float32),
    )


# ----------------------------------------------------------------------------
# Main
# ----------------------------------------------------------------------------

if __name__ == "__main__":
    d_model, num_heads, d_ff = 32, 4, 64
    batch, seq_len = 2, 8

    key = jax.random.PRNGKey(0)
    kp, kx = jax.random.split(key)
    params = init_encoder_layer_params(kp, d_model, d_ff)

    x = jax.random.normal(kx, (batch, seq_len, d_model), jnp.float32)
    # key-padding mask: last token of each sequence is padding (masked out)
    mask = jnp.zeros((batch, 1, seq_len), dtype=bool).at[:, :, -1].set(True)

    fwd = jax.jit(lambda xx, mm_: encoder_layer(xx, mm_, params, num_heads))
    out = fwd(x, mask)
    jax.block_until_ready(out)

    assert out.shape == (batch, seq_len, d_model)
    assert bool(jnp.all(jnp.isfinite(out)))

    # Tight check vs a reference that emulates the kernel's bf16 MXU operands
    # (residual error: approx EUP reciprocal in softmax + accumulation order).
    ref_bf16 = encoder_layer_ref(x, mask, params, num_heads,
                                 matmul_dtype=jnp.bfloat16, fold_q_scale=True)
    assert bool(jnp.allclose(out, ref_bf16, rtol=1e-2, atol=1e-2))

    # Fidelity check vs the pure-f32 (PyTorch-semantics) reference; tolerance
    # here is bounded by bf16 operand rounding, not by kernel structure.
    ref_f32 = encoder_layer_ref(x, mask, params, num_heads)
    assert bool(jnp.allclose(out, ref_f32, rtol=4e-2, atol=4e-2))

    print("KERNEL_OK")
</pallas_src>

<mosaic_0001>
module attributes {stable_mosaic.version = 11 : i64} {
  func.func @_encoder_layer_kernel(%arg0: i32, %arg1: i32, %arg2: memref<1x8x32xf32, #tpu.memory_space<vmem>>, %arg3: memref<1x8x32xf32, #tpu.memory_space<vmem>>, %arg4: memref<1x1x8xf32, #tpu.memory_space<vmem>>, %arg5: memref<1x32xf32, #tpu.memory_space<vmem>>, %arg6: memref<1x32xf32, #tpu.memory_space<vmem>>, %arg7: memref<32x32xbf16, #tpu.memory_space<vmem>>, %arg8: memref<1x32xf32, #tpu.memory_space<vmem>>, %arg9: memref<32x64xbf16, #tpu.memory_space<vmem>>, %arg10: memref<1x64xf32, #tpu.memory_space<vmem>>, %arg11: memref<32x32xbf16, #tpu.memory_space<vmem>>, %arg12: memref<1x32xf32, #tpu.memory_space<vmem>>, %arg13: memref<1x32xf32, #tpu.memory_space<vmem>>, %arg14: memref<1x32xf32, #tpu.memory_space<vmem>>, %arg15: memref<32x64xbf16, #tpu.memory_space<vmem>>, %arg16: memref<1x64xf32, #tpu.memory_space<vmem>>, %arg17: memref<64x32xbf16, #tpu.memory_space<vmem>>, %arg18: memref<1x32xf32, #tpu.memory_space<vmem>>, %arg19: memref<1x8x32xf32, #tpu.memory_space<vmem>>, %arg20: memref<8x64xbf16, #tpu.memory_space<vmem>>) attributes {dimension_semantics = [#tpu.dimension_semantics<parallel>, #tpu.dimension_semantics<arbitrary>], iteration_bounds = array<i64: 2, 1>, scalar_prefetch = 0 : i64, scratch_operands = 1 : i64, tpu.core_type = #tpu.core_type<tc>, window_params = [{transform_indices = @transform_0, window_bounds = array<i64: 1, 8, 32>}, {transform_indices = @transform_1, window_bounds = array<i64: 1, 8, 32>}, {transform_indices = @transform_2, window_bounds = array<i64: 1, 1, 8>}, {pipeline_mode = #tpu.pipeline_mode<synchronous>, transform_indices = @transform_3, window_bounds = array<i64: 1, 32>}, {pipeline_mode = #tpu.pipeline_mode<synchronous>, transform_indices = @transform_4, window_bounds = array<i64: 1, 32>}, {pipeline_mode = #tpu.pipeline_mode<synchronous>, transform_indices = @transform_5, window_bounds = array<i64: 32, 32>}, {pipeline_mode = #tpu.pipeline_mode<synchronous>, transform_indices = @transform_6, window_bounds = array<i64: 1, 32>}, {pipeline_mode = #tpu.pipeline_mode<synchronous>, transform_indices = @transform_7, window_bounds = array<i64: 32, 64>}, {pipeline_mode = #tpu.pipeline_mode<synchronous>, transform_indices = @transform_8, window_bounds = array<i64: 1, 64>}, {pipeline_mode = #tpu.pipeline_mode<synchronous>, transform_indices = @transform_9, window_bounds = array<i64: 32, 32>}, {pipeline_mode = #tpu.pipeline_mode<synchronous>, transform_indices = @transform_10, window_bounds = array<i64: 1, 32>}, {pipeline_mode = #tpu.pipeline_mode<synchronous>, transform_indices = @transform_11, window_bounds = array<i64: 1, 32>}, {pipeline_mode = #tpu.pipeline_mode<synchronous>, transform_indices = @transform_12, window_bounds = array<i64: 1, 32>}, {pipeline_mode = #tpu.pipeline_mode<synchronous>, transform_indices = @transform_13, window_bounds = array<i64: 32, 64>}, {pipeline_mode = #tpu.pipeline_mode<synchronous>, transform_indices = @transform_14, window_bounds = array<i64: 1, 64>}, {pipeline_mode = #tpu.pipeline_mode<synchronous>, transform_indices = @transform_15, window_bounds = array<i64: 64, 32>}, {pipeline_mode = #tpu.pipeline_mode<synchronous>, transform_indices = @transform_16, window_bounds = array<i64: 1, 32>}, {transform_indices = @transform_17, window_bounds = array<i64: 1, 8, 32>}]} {
    %c0_i32 = arith.constant 0 : i32
    %0 = arith.cmpi eq, %arg1, %c0_i32 : i32
    %1 = arith.extui %0 : i1 to i32
    %c0_i32_0 = arith.constant 0 : i32
    %2 = arith.cmpi ne, %1, %c0_i32_0 : i32
    scf.if %2 {
      %c0_88 = arith.constant 0 : index
      %c0_89 = arith.constant 0 : index
      %c0_90 = arith.constant 0 : index
      %184 = vector.load %arg3[%c0_88, %c0_89, %c0_90] : memref<1x8x32xf32, #tpu.memory_space<vmem>>, vector<1x8x32xf32>
      %185 = vector.shape_cast %184 : vector<1x8x32xf32> to vector<8x32xf32>
      %cst_91 = arith.constant dense<0.000000e+00> : vector<8xf32>
      %186 = vector.multi_reduction <add>, %185, %cst_91 [1] : vector<8x32xf32> to vector<8xf32>
      %187 = vector.shape_cast %186 : vector<8xf32> to vector<8x1xf32>
      %cst_92 = arith.constant 3.200000e+01 : f32
      %188 = vector.broadcast %cst_92 : f32 to vector<8x1xf32>
      %189 = arith.divf %187, %188 : vector<8x1xf32>
      %190 = vector.broadcast %189 : vector<8x1xf32> to vector<8x32xf32>
      %191 = arith.subf %185, %190 : vector<8x32xf32>
      %192 = arith.mulf %191, %191 : vector<8x32xf32>
      %cst_93 = arith.constant dense<0.000000e+00> : vector<8xf32>
      %193 = vector.multi_reduction <add>, %192, %cst_93 [1] : vector<8x32xf32> to vector<8xf32>
      %194 = vector.shape_cast %193 : vector<8xf32> to vector<8x1xf32>
      %cst_94 = arith.constant 3.200000e+01 : f32
      %195 = vector.broadcast %cst_94 : f32 to vector<8x1xf32>
      %196 = arith.divf %194, %195 : vector<8x1xf32>
      %cst_95 = arith.constant 9.99999974E-6 : f32
      %197 = vector.broadcast %cst_95 : f32 to vector<8x1xf32>
      %198 = arith.addf %196, %197 : vector<8x1xf32>
      %199 = math.rsqrt %198 : vector<8x1xf32>
      %200 = vector.broadcast %199 : vector<8x1xf32> to vector<8x32xf32>
      %201 = arith.mulf %191, %200 : vector<8x32xf32>
      %c0_96 = arith.constant 0 : index
      %c0_97 = arith.constant 0 : index
      %202 = vector.load %arg5[%c0_96, %c0_97] : memref<1x32xf32, #tpu.memory_space<vmem>>, vector<1x32xf32>
      %203 = vector.broadcast %202 : vector<1x32xf32> to vector<8x32xf32>
      %204 = arith.mulf %201, %203 : vector<8x32xf32>
      %c0_98 = arith.constant 0 : index
      %c0_99 = arith.constant 0 : index
      %205 = vector.load %arg6[%c0_98, %c0_99] : memref<1x32xf32, #tpu.memory_space<vmem>>, vector<1x32xf32>
      %206 = vector.broadcast %205 : vector<1x32xf32> to vector<8x32xf32>
      %207 = arith.addf %204, %206 : vector<8x32xf32>
      %208 = arith.truncf %207 : vector<8x32xf32> to vector<8x32xbf16>
      %c0_100 = arith.constant 0 : index
      %c0_101 = arith.constant 0 : index
      %209 = vector.load %arg9[%c0_100, %c0_101] : memref<32x64xbf16, #tpu.memory_space<vmem>>, vector<32x64xbf16>
      %cst_102 = arith.constant dense<0.000000e+00> : vector<8x64xf32>
      %210 = tpu.matmul %208, %209, %cst_102 {dimension_numbers = #tpu.dot_dimension_numbers<[1], [0], [0], [1], [0, 0, 1, 1], [], []>} : vector<8x32xbf16>, vector<32x64xbf16>, vector<8x64xf32> -> vector<8x64xf32>
      %c0_103 = arith.constant 0 : index
      %c0_104 = arith.constant 0 : index
      %211 = vector.load %arg10[%c0_103, %c0_104] : memref<1x64xf32, #tpu.memory_space<vmem>>, vector<1x64xf32>
      %212 = vector.broadcast %211 : vector<1x64xf32> to vector<8x64xf32>
      %213 = arith.addf %210, %212 : vector<8x64xf32>
      %214 = arith.truncf %213 : vector<8x64xf32> to vector<8x64xbf16>
      %c0_105 = arith.constant 0 : index
      %c0_106 = arith.constant 0 : index
      %215 = vector.load %arg20[%c0_105, %c0_106] : memref<8x64xbf16, #tpu.memory_space<vmem>>, vector<8x64xbf16>
      tpu.vector_store %arg20[%c0_105, %c0_106], %214 {strides = array<i32>} : memref<8x64xbf16, #tpu.memory_space<vmem>>, vector<8x64xbf16>,
    } else {
    }
    %c0 = arith.constant 0 : index
    %c0_1 = arith.constant 0 : index
    %c0_2 = arith.constant 0 : index
    %3 = vector.load %arg2[%c0, %c0_1, %c0_2] : memref<1x8x32xf32, #tpu.memory_space<vmem>>, vector<1x8x32xf32>
    %4 = vector.shape_cast %3 : vector<1x8x32xf32> to vector<8x32xf32>
    %cst = arith.constant dense<0.000000e+00> : vector<8xf32>
    %5 = vector.multi_reduction <add>, %4, %cst [1] : vector<8x32xf32> to vector<8xf32>
    %6 = vector.shape_cast %5 : vector<8xf32> to vector<8x1xf32>
    %cst_3 = arith.constant 3.200000e+01 : f32
    %7 = vector.broadcast %cst_3 : f32 to vector<8x1xf32>
    %8 = arith.divf %6, %7 : vector<8x1xf32>
    %9 = vector.broadcast %8 : vector<8x1xf32> to vector<8x32xf32>
    %10 = arith.subf %4, %9 : vector<8x32xf32>
    %11 = arith.mulf %10, %10 : vector<8x32xf32>
    %cst_4 = arith.constant dense<0.000000e+00> : vector<8xf32>
    %12 = vector.multi_reduction <add>, %11, %cst_4 [1] : vector<8x32xf32> to vector<8xf32>
    %13 = vector.shape_cast %12 : vector<8xf32> to vector<8x1xf32>
    %cst_5 = arith.constant 3.200000e+01 : f32
    %14 = vector.broadcast %cst_5 : f32 to vector<8x1xf32>
    %15 = arith.divf %13, %14 : vector<8x1xf32>
    %cst_6 = arith.constant 9.99999974E-6 : f32
    %16 = vector.broadcast %cst_6 : f32 to vector<8x1xf32>
    %17 = arith.addf %15, %16 : vector<8x1xf32>
    %18 = math.rsqrt %17 : vector<8x1xf32>
    %19 = vector.broadcast %18 : vector<8x1xf32> to vector<8x32xf32>
    %20 = arith.mulf %10, %19 : vector<8x32xf32>
    %c0_7 = arith.constant 0 : index
    %c0_8 = arith.constant 0 : index
    %21 = vector.load %arg5[%c0_7, %c0_8] : memref<1x32xf32, #tpu.memory_space<vmem>>, vector<1x32xf32>
    %22 = vector.broadcast %21 : vector<1x32xf32> to vector<8x32xf32>
    %23 = arith.mulf %20, %22 : vector<8x32xf32>
    %c0_9 = arith.constant 0 : index
    %c0_10 = arith.constant 0 : index
    %24 = vector.load %arg6[%c0_9, %c0_10] : memref<1x32xf32, #tpu.memory_space<vmem>>, vector<1x32xf32>
    %25 = vector.broadcast %24 : vector<1x32xf32> to vector<8x32xf32>
    %26 = arith.addf %23, %25 : vector<8x32xf32>
    %27 = arith.truncf %26 : vector<8x32xf32> to vector<8x32xbf16>
    %c0_11 = arith.constant 0 : index
    %c0_12 = arith.constant 0 : index
    %28 = vector.load %arg7[%c0_11, %c0_12] : memref<32x32xbf16, #tpu.memory_space<vmem>>, vector<32x32xbf16>
    %cst_13 = arith.constant dense<0.000000e+00> : vector<8x32xf32>
    %29 = tpu.matmul %27, %28, %cst_13 {dimension_numbers = #tpu.dot_dimension_numbers<[1], [0], [0], [1], [0, 0, 1, 1], [], []>} : vector<8x32xbf16>, vector<32x32xbf16>, vector<8x32xf32> -> vector<8x32xf32>
    %c0_14 = arith.constant 0 : index
    %c0_15 = arith.constant 0 : index
    %30 = vector.load %arg8[%c0_14, %c0_15] : memref<1x32xf32, #tpu.memory_space<vmem>>, vector<1x32xf32>
    %31 = vector.broadcast %30 : vector<1x32xf32> to vector<8x32xf32>
    %32 = arith.addf %29, %31 : vector<8x32xf32>
    %c0_16 = arith.constant 0 : index
    %c0_17 = arith.constant 0 : index
    %c0_18 = arith.constant 0 : index
    %33 = vector.load %arg4[%c0_16, %c0_17, %c0_18] : memref<1x1x8xf32, #tpu.memory_space<vmem>>, vector<1x1x8xf32>
    %34 = vector.shape_cast %33 : vector<1x1x8xf32> to vector<1x8xf32>
    %cst_19 = arith.constant 5.000000e-01 : f32
    %35 = vector.broadcast %cst_19 : f32 to vector<1x8xf32>
    %36 = arith.cmpf ogt, %34, %35 : vector<1x8xf32>
    %cst_20 = arith.constant 0.000000e+00 : f32
    %37 = vector.broadcast %cst_20 : f32 to vector<8x32xf32>
    %38 = vector.extract_strided_slice %32 {offsets = [0, 0], sizes = [8, 8], strides = [1, 1]} : vector<8x32xf32> to vector<8x8xf32>
    %39 = arith.truncf %38 : vector<8x8xf32> to vector<8x8xbf16>
    %c0_21 = arith.constant 0 : index
    %c0_22 = arith.constant 0 : index
    %40 = vector.load %arg20[%c0_21, %c0_22] : memref<8x64xbf16, #tpu.memory_space<vmem>>, vector<8x8xbf16>
    %c0_23 = arith.constant 0 : index
    %c32 = arith.constant 32 : index
    %41 = vector.load %arg20[%c0_23, %c32] : memref<8x64xbf16, #tpu.memory_space<vmem>>, vector<8x8xbf16>
    %cst_24 = arith.constant dense<0.000000e+00> : vector<8x8xf32>
    %42 = tpu.matmul %39, %40, %cst_24 {dimension_numbers = #tpu.dot_dimension_numbers<[1], [1], [0], [0], [0, 0, 1, 0], [], []>} : vector<8x8xbf16>, vector<8x8xbf16>, vector<8x8xf32> -> vector<8x8xf32>
    %cst_25 = arith.constant -1.000000e+09 : f32
    %43 = vector.shape_cast %36 : vector<1x8xi1> to vector<1x8xi1>
    %44 = vector.broadcast %43 : vector<1x8xi1> to vector<8x8xi1>
    %45 = vector.broadcast %cst_25 : f32 to vector<8x8xf32>
    %46 = arith.select %44, %45, %42 : vector<8x8xi1>, vector<8x8xf32>
    %cst_26 = arith.constant dense<0xFF800000> : vector<8xf32>
    %47 = vector.multi_reduction <maximumf>, %46, %cst_26 [1] : vector<8x8xf32> to vector<8xf32>
    %48 = vector.shape_cast %47 : vector<8xf32> to vector<8x1xf32>
    %49 = vector.broadcast %48 : vector<8x1xf32> to vector<8x8xf32>
    %50 = arith.subf %46, %49 : vector<8x8xf32>
    %51 = math.exp %50 : vector<8x8xf32>
    %cst_27 = arith.constant dense<0.000000e+00> : vector<8xf32>
    %52 = vector.multi_reduction <add>, %51, %cst_27 [1] : vector<8x8xf32> to vector<8xf32>
    %53 = vector.shape_cast %52 : vector<8xf32> to vector<8x1xf32>
    %54 = tpu.reciprocal %53 {approx = true} : vector<8x1xf32> -> vector<8x1xf32>
    %55 = vector.broadcast %54 : vector<8x1xf32> to vector<8x8xf32>
    %56 = arith.mulf %51, %55 : vector<8x8xf32>
    %57 = arith.truncf %56 : vector<8x8xf32> to vector<8x8xbf16>
    %cst_28 = arith.constant dense<0.000000e+00> : vector<8x8xf32>
    %58 = tpu.matmul %57, %41, %cst_28 {dimension_numbers = #tpu.dot_dimension_numbers<[1], [0], [0], [1], [0, 0, 1, 1], [], []>} : vector<8x8xbf16>, vector<8x8xbf16>, vector<8x8xf32> -> vector<8x8xf32>
    %59 = arith.truncf %58 : vector<8x8xf32> to vector<8x8xbf16>
    %c0_29 = arith.constant 0 : index
    %c0_30 = arith.constant 0 : index
    %60 = vector.load %arg11[%c0_29, %c0_30] : memref<32x32xbf16, #tpu.memory_space<vmem>>, vector<8x32xbf16>
    %cst_31 = arith.constant dense<0.000000e+00> : vector<8x32xf32>
    %61 = tpu.matmul %59, %60, %cst_31 {dimension_numbers = #tpu.dot_dimension_numbers<[1], [0], [0], [1], [0, 0, 1, 1], [], []>} : vector<8x8xbf16>, vector<8x32xbf16>, vector<8x32xf32> -> vector<8x32xf32>
    %62 = arith.addf %37, %61 : vector<8x32xf32>
    %63 = vector.extract_strided_slice %32 {offsets = [0, 8], sizes = [8, 8], strides = [1, 1]} : vector<8x32xf32> to vector<8x8xf32>
    %64 = arith.truncf %63 : vector<8x8xf32> to vector<8x8xbf16>
    %c0_32 = arith.constant 0 : index
    %c8 = arith.constant 8 : index
    %65 = vector.load %arg20[%c0_32, %c8] : memref<8x64xbf16, #tpu.memory_space<vmem>>, vector<8x8xbf16>
    %c0_33 = arith.constant 0 : index
    %c40 = arith.constant 40 : index
    %66 = vector.load %arg20[%c0_33, %c40] : memref<8x64xbf16, #tpu.memory_space<vmem>>, vector<8x8xbf16>
    %cst_34 = arith.constant dense<0.000000e+00> : vector<8x8xf32>
    %67 = tpu.matmul %64, %65, %cst_34 {dimension_numbers = #tpu.dot_dimension_numbers<[1], [1], [0], [0], [0, 0, 1, 0], [], []>} : vector<8x8xbf16>, vector<8x8xbf16>, vector<8x8xf32> -> vector<8x8xf32>
    %cst_35 = arith.constant -1.000000e+09 : f32
    %68 = vector.shape_cast %36 : vector<1x8xi1> to vector<1x8xi1>
    %69 = vector.broadcast %68 : vector<1x8xi1> to vector<8x8xi1>
    %70 = vector.broadcast %cst_35 : f32 to vector<8x8xf32>
    %71 = arith.select %69, %70, %67 : vector<8x8xi1>, vector<8x8xf32>
    %cst_36 = arith.constant dense<0xFF800000> : vector<8xf32>
    %72 = vector.multi_reduction <maximumf>, %71, %cst_36 [1] : vector<8x8xf32> to vector<8xf32>
    %73 = vector.shape_cast %72 : vector<8xf32> to vector<8x1xf32>
    %74 = vector.broadcast %73 : vector<8x1xf32> to vector<8x8xf32>
    %75 = arith.subf %71, %74 : vector<8x8xf32>
    %76 = math.exp %75 : vector<8x8xf32>
    %cst_37 = arith.constant dense<0.000000e+00> : vector<8xf32>
    %77 = vector.multi_reduction <add>, %76, %cst_37 [1] : vector<8x8xf32> to vector<8xf32>
    %78 = vector.shape_cast %77 : vector<8xf32> to vector<8x1xf32>
    %79 = tpu.reciprocal %78 {approx = true} : vector<8x1xf32> -> vector<8x1xf32>
    %80 = vector.broadcast %79 : vector<8x1xf32> to vector<8x8xf32>
    %81 = arith.mulf %76, %80 : vector<8x8xf32>
    %82 = arith.truncf %81 : vector<8x8xf32> to vector<8x8xbf16>
    %cst_38 = arith.constant dense<0.000000e+00> : vector<8x8xf32>
    %83 = tpu.matmul %82, %66, %cst_38 {dimension_numbers = #tpu.dot_dimension_numbers<[1], [0], [0], [1], [0, 0, 1, 1], [], []>} : vector<8x8xbf16>, vector<8x8xbf16>, vector<8x8xf32> -> vector<8x8xf32>
    %84 = arith.truncf %83 : vector<8x8xf32> to vector<8x8xbf16>
    %c8_39 = arith.constant 8 : index
    %c0_40 = arith.constant 0 : index
    %85 = vector.load %arg11[%c8_39, %c0_40] : memref<32x32xbf16, #tpu.memory_space<vmem>>, vector<8x32xbf16>
    %cst_41 = arith.constant dense<0.000000e+00> : vector<8x32xf32>
    %86 = tpu.matmul %84, %85, %cst_41 {dimension_numbers = #tpu.dot_dimension_numbers<[1], [0], [0], [1], [0, 0, 1, 1], [], []>} : vector<8x8xbf16>, vector<8x32xbf16>, vector<8x32xf32> -> vector<8x32xf32>
    %87 = arith.addf %62, %86 : vector<8x32xf32>
    %88 = vector.extract_strided_slice %32 {offsets = [0, 16], sizes = [8, 8], strides = [1, 1]} : vector<8x32xf32> to vector<8x8xf32>
    %89 = arith.truncf %88 : vector<8x8xf32> to vector<8x8xbf16>
    %c0_42 = arith.constant 0 : index
    %c16 = arith.constant 16 : index
    %90 = vector.load %arg20[%c0_42, %c16] : memref<8x64xbf16, #tpu.memory_space<vmem>>, vector<8x8xbf16>
    %c0_43 = arith.constant 0 : index
    %c48 = arith.constant 48 : index
    %91 = vector.load %arg20[%c0_43, %c48] : memref<8x64xbf16, #tpu.memory_space<vmem>>, vector<8x8xbf16>
    %cst_44 = arith.constant dense<0.000000e+00> : vector<8x8xf32>
    %92 = tpu.matmul %89, %90, %cst_44 {dimension_numbers = #tpu.dot_dimension_numbers<[1], [1], [0], [0], [0, 0, 1, 0], [], []>} : vector<8x8xbf16>, vector<8x8xbf16>, vector<8x8xf32> -> vector<8x8xf32>
    %cst_45 = arith.constant -1.000000e+09 : f32
    %93 = vector.shape_cast %36 : vector<1x8xi1> to vector<1x8xi1>
    %94 = vector.broadcast %93 : vector<1x8xi1> to vector<8x8xi1>
    %95 = vector.broadcast %cst_45 : f32 to vector<8x8xf32>
    %96 = arith.select %94, %95, %92 : vector<8x8xi1>, vector<8x8xf32>
    %cst_46 = arith.constant dense<0xFF800000> : vector<8xf32>
    %97 = vector.multi_reduction <maximumf>, %96, %cst_46 [1] : vector<8x8xf32> to vector<8xf32>
    %98 = vector.shape_cast %97 : vector<8xf32> to vector<8x1xf32>
    %99 = vector.broadcast %98 : vector<8x1xf32> to vector<8x8xf32>
    %100 = arith.subf %96, %99 : vector<8x8xf32>
    %101 = math.exp %100 : vector<8x8xf32>
    %cst_47 = arith.constant dense<0.000000e+00> : vector<8xf32>
    %102 = vector.multi_reduction <add>, %101, %cst_47 [1] : vector<8x8xf32> to vector<8xf32>
    %103 = vector.shape_cast %102 : vector<8xf32> to vector<8x1xf32>
    %104 = tpu.reciprocal %103 {approx = true} : vector<8x1xf32> -> vector<8x1xf32>
    %105 = vector.broadcast %104 : vector<8x1xf32> to vector<8x8xf32>
    %106 = arith.mulf %101, %105 : vector<8x8xf32>
    %107 = arith.truncf %106 : vector<8x8xf32> to vector<8x8xbf16>
    %cst_48 = arith.constant dense<0.000000e+00> : vector<8x8xf32>
    %108 = tpu.matmul %107, %91, %cst_48 {dimension_numbers = #tpu.dot_dimension_numbers<[1], [0], [0], [1], [0, 0, 1, 1], [], []>} : vector<8x8xbf16>, vector<8x8xbf16>, vector<8x8xf32> -> vector<8x8xf32>
    %109 = arith.truncf %108 : vector<8x8xf32> to vector<8x8xbf16>
    %c16_49 = arith.constant 16 : index
    %c0_50 = arith.constant 0 : index
    %110 = vector.load %arg11[%c16_49, %c0_50] : memref<32x32xbf16, #tpu.memory_space<vmem>>, vector<8x32xbf16>
    %cst_51 = arith.constant dense<0.000000e+00> : vector<8x32xf32>
    %111 = tpu.matmul %109, %110, %cst_51 {dimension_numbers = #tpu.dot_dimension_numbers<[1], [0], [0], [1], [0, 0, 1, 1], [], []>} : vector<8x8xbf16>, vector<8x32xbf16>, vector<8x32xf32> -> vector<8x32xf32>
    %112 = arith.addf %87, %111 : vector<8x32xf32>
    %113 = vector.extract_strided_slice %32 {offsets = [0, 24], sizes = [8, 8], strides = [1, 1]} : vector<8x32xf32> to vector<8x8xf32>
    %114 = arith.truncf %113 : vector<8x8xf32> to vector<8x8xbf16>
    %c0_52 = arith.constant 0 : index
    %c24 = arith.constant 24 : index
    %115 = vector.load %arg20[%c0_52, %c24] : memref<8x64xbf16, #tpu.memory_space<vmem>>, vector<8x8xbf16>
    %c0_53 = arith.constant 0 : index
    %c56 = arith.constant 56 : index
    %116 = vector.load %arg20[%c0_53, %c56] : memref<8x64xbf16, #tpu.memory_space<vmem>>, vector<8x8xbf16>
    %cst_54 = arith.constant dense<0.000000e+00> : vector<8x8xf32>
    %117 = tpu.matmul %114, %115, %cst_54 {dimension_numbers = #tpu.dot_dimension_numbers<[1], [1], [0], [0], [0, 0, 1, 0], [], []>} : vector<8x8xbf16>, vector<8x8xbf16>, vector<8x8xf32> -> vector<8x8xf32>
    %cst_55 = arith.constant -1.000000e+09 : f32
    %118 = vector.shape_cast %36 : vector<1x8xi1> to vector<1x8xi1>
    %119 = vector.broadcast %118 : vector<1x8xi1> to vector<8x8xi1>
    %120 = vector.broadcast %cst_55 : f32 to vector<8x8xf32>
    %121 = arith.select %119, %120, %117 : vector<8x8xi1>, vector<8x8xf32>
    %cst_56 = arith.constant dense<0xFF800000> : vector<8xf32>
    %122 = vector.multi_reduction <maximumf>, %121, %cst_56 [1] : vector<8x8xf32> to vector<8xf32>
    %123 = vector.shape_cast %122 : vector<8xf32> to vector<8x1xf32>
    %124 = vector.broadcast %123 : vector<8x1xf32> to vector<8x8xf32>
    %125 = arith.subf %121, %124 : vector<8x8xf32>
    %126 = math.exp %125 : vector<8x8xf32>
    %cst_57 = arith.constant dense<0.000000e+00> : vector<8xf32>
    %127 = vector.multi_reduction <add>, %126, %cst_57 [1] : vector<8x8xf32> to vector<8xf32>
    %128 = vector.shape_cast %127 : vector<8xf32> to vector<8x1xf32>
    %129 = tpu.reciprocal %128 {approx = true} : vector<8x1xf32> -> vector<8x1xf32>
    %130 = vector.broadcast %129 : vector<8x1xf32> to vector<8x8xf32>
    %131 = arith.mulf %126, %130 : vector<8x8xf32>
    %132 = arith.truncf %131 : vector<8x8xf32> to vector<8x8xbf16>
    %cst_58 = arith.constant dense<0.000000e+00> : vector<8x8xf32>
    %133 = tpu.matmul %132, %116, %cst_58 {dimension_numbers = #tpu.dot_dimension_numbers<[1], [0], [0], [1], [0, 0, 1, 1], [], []>} : vector<8x8xbf16>, vector<8x8xbf16>, vector<8x8xf32> -> vector<8x8xf32>
    %134 = arith.truncf %133 : vector<8x8xf32> to vector<8x8xbf16>
    %c24_59 = arith.constant 24 : index
    %c0_60 = arith.constant 0 : index
    %135 = vector.load %arg11[%c24_59, %c0_60] : memref<32x32xbf16, #tpu.memory_space<vmem>>, vector<8x32xbf16>
    %cst_61 = arith.constant dense<0.000000e+00> : vector<8x32xf32>
    %136 = tpu.matmul %134, %135, %cst_61 {dimension_numbers = #tpu.dot_dimension_numbers<[1], [0], [0], [1], [0, 0, 1, 1], [], []>} : vector<8x8xbf16>, vector<8x32xbf16>, vector<8x32xf32> -> vector<8x32xf32>
    %137 = arith.addf %112, %136 : vector<8x32xf32>
    %138 = arith.addf %4, %137 : vector<8x32xf32>
    %c0_62 = arith.constant 0 : index
    %c0_63 = arith.constant 0 : index
    %139 = vector.load %arg12[%c0_62, %c0_63] : memref<1x32xf32, #tpu.memory_space<vmem>>, vector<1x32xf32>
    %140 = vector.broadcast %139 : vector<1x32xf32> to vector<8x32xf32>
    %141 = arith.addf %138, %140 : vector<8x32xf32>
    %cst_64 = arith.constant dense<0.000000e+00> : vector<8xf32>
    %142 = vector.multi_reduction <add>, %141, %cst_64 [1] : vector<8x32xf32> to vector<8xf32>
    %143 = vector.shape_cast %142 : vector<8xf32> to vector<8x1xf32>
    %cst_65 = arith.constant 3.200000e+01 : f32
    %144 = vector.broadcast %cst_65 : f32 to vector<8x1xf32>
    %145 = arith.divf %143, %144 : vector<8x1xf32>
    %146 = vector.broadcast %145 : vector<8x1xf32> to vector<8x32xf32>
    %147 = arith.subf %141, %146 : vector<8x32xf32>
    %148 = arith.mulf %147, %147 : vector<8x32xf32>
    %cst_66 = arith.constant dense<0.000000e+00> : vector<8xf32>
    %149 = vector.multi_reduction <add>, %148, %cst_66 [1] : vector<8x32xf32> to vector<8xf32>
    %150 = vector.shape_cast %149 : vector<8xf32> to vector<8x1xf32>
    %cst_67 = arith.constant 3.200000e+01 : f32
    %151 = vector.broadcast %cst_67 : f32 to vector<8x1xf32>
    %152 = arith.divf %150, %151 : vector<8x1xf32>
    %cst_68 = arith.constant 9.99999974E-6 : f32
    %153 = vector.broadcast %cst_68 : f32 to vector<8x1xf32>
    %154 = arith.addf %152, %153 : vector<8x1xf32>
    %155 = math.rsqrt %154 : vector<8x1xf32>
    %156 = vector.broadcast %155 : vector<8x1xf32> to vector<8x32xf32>
    %157 = arith.mulf %147, %156 : vector<8x32xf32>
    %c0_69 = arith.constant 0 : index
    %c0_70 = arith.constant 0 : index
    %158 = vector.load %arg13[%c0_69, %c0_70] : memref<1x32xf32, #tpu.memory_space<vmem>>, vector<1x32xf32>
    %159 = vector.broadcast %158 : vector<1x32xf32> to vector<8x32xf32>
    %160 = arith.mulf %157, %159 : vector<8x32xf32>
    %c0_71 = arith.constant 0 : index
    %c0_72 = arith.constant 0 : index
    %161 = vector.load %arg14[%c0_71, %c0_72] : memref<1x32xf32, #tpu.memory_space<vmem>>, vector<1x32xf32>
    %162 = vector.broadcast %161 : vector<1x32xf32> to vector<8x32xf32>
    %163 = arith.addf %160, %162 : vector<8x32xf32>
    %164 = arith.truncf %163 : vector<8x32xf32> to vector<8x32xbf16>
    %cst_73 = arith.constant 0.000000e+00 : f32
    %165 = vector.broadcast %cst_73 : f32 to vector<8x32xf32>
    %c0_74 = arith.constant 0 : index
    %c0_75 = arith.constant 0 : index
    %166 = vector.load %arg15[%c0_74, %c0_75] : memref<32x64xbf16, #tpu.memory_space<vmem>>, vector<32x64xbf16>
    %cst_76 = arith.constant dense<0.000000e+00> : vector<8x64xf32>
    %167 = tpu.matmul %164, %166, %cst_76 {dimension_numbers = #tpu.dot_dimension_numbers<[1], [0], [0], [1], [0, 0, 1, 1], [], []>} : vector<8x32xbf16>, vector<32x64xbf16>, vector<8x64xf32> -> vector<8x64xf32>
    %c0_77 = arith.constant 0 : index
    %c0_78 = arith.constant 0 : index
    %168 = vector.load %arg16[%c0_77, %c0_78] : memref<1x64xf32, #tpu.memory_space<vmem>>, vector<1x64xf32>
    %169 = vector.broadcast %168 : vector<1x64xf32> to vector<8x64xf32>
    %170 = arith.addf %167, %169 : vector<8x64xf32>
    %cst_79 = arith.constant 0.000000e+00 : f32
    %171 = vector.broadcast %cst_79 : f32 to vector<8x64xf32>
    %172 = arith.maximumf %170, %171 : vector<8x64xf32>
    %173 = arith.truncf %172 : vector<8x64xf32> to vector<8x64xbf16>
    %c0_80 = arith.constant 0 : index
    %c0_81 = arith.constant 0 : index
    %174 = vector.load %arg17[%c0_80, %c0_81] : memref<64x32xbf16, #tpu.memory_space<vmem>>, vector<64x32xbf16>
    %cst_82 = arith.constant dense<0.000000e+00> : vector<8x32xf32>
    %175 = tpu.matmul %173, %174, %cst_82 {dimension_numbers = #tpu.dot_dimension_numbers<[1], [0], [0], [1], [0, 0, 1, 1], [], []>} : vector<8x64xbf16>, vector<64x32xbf16>, vector<8x32xf32> -> vector<8x32xf32>
    %176 = arith.addf %165, %175 : vector<8x32xf32>
    %177 = arith.addf %141, %176 : vector<8x32xf32>
    %c0_83 = arith.constant 0 : index
    %c0_84 = arith.constant 0 : index
    %178 = vector.load %arg18[%c0_83, %c0_84] : memref<1x32xf32, #tpu.memory_space<vmem>>, vector<1x32xf32>
    %179 = vector.broadcast %178 : vector<1x32xf32> to vector<8x32xf32>
    %180 = arith.addf %177, %179 : vector<8x32xf32>
    %c0_85 = arith.constant 0 : index
    %c0_86 = arith.constant 0 : index
    %c0_87 = arith.constant 0 : index
    %181 = vector.load %arg19[%c0_85, %c0_86, %c0_87] : memref<1x8x32xf32, #tpu.memory_space<vmem>>, vector<1x8x32xf32>
    %182 = vector.shape_cast %181 : vector<1x8x32xf32> to vector<8x32xf32>
    %183 = vector.shape_cast %180 : vector<8x32xf32> to vector<1x8x32xf32>
    tpu.vector_store %arg19[%c0_85, %c0_86, %c0_87], %183 {strides = array<i32>} : memref<1x8x32xf32, #tpu.memory_space<vmem>>, vector<1x8x32xf32>,
    return
  }
  func.func @transform_0(%arg0: i32, %arg1: i32) -> (i32, i32, i32) {
    %c0_i32 = arith.constant 0 : i32
    %c0_i32_0 = arith.constant 0 : i32
    return %arg0, %arg1, %c0_i32 : i32, i32, i32
  }
  func.func @transform_1(%arg0: i32, %arg1: i32) -> (i32, i32, i32) {
    %c0_i32 = arith.constant 0 : i32
    %c0_i32_0 = arith.constant 0 : i32
    %c0_i32_1 = arith.constant 0 : i32
    return %arg0, %c0_i32, %c0_i32_0 : i32, i32, i32
  }
  func.func @transform_2(%arg0: i32, %arg1: i32) -> (i32, i32, i32) {
    %c0_i32 = arith.constant 0 : i32
    %c0_i32_0 = arith.constant 0 : i32
    %c0_i32_1 = arith.constant 0 : i32
    return %arg0, %c0_i32, %c0_i32_0 : i32, i32, i32
  }
  func.func @transform_3(%arg0: i32, %arg1: i32) -> (i32, i32) {
    %c0_i32 = arith.constant 0 : i32
    %c0_i32_0 = arith.constant 0 : i32
    %c0_i32_1 = arith.constant 0 : i32
    return %c0_i32, %c0_i32_0 : i32, i32
  }
  func.func @transform_4(%arg0: i32, %arg1: i32) -> (i32, i32) {
    %c0_i32 = arith.constant 0 : i32
    %c0_i32_0 = arith.constant 0 : i32
    %c0_i32_1 = arith.constant 0 : i32
    return %c0_i32, %c0_i32_0 : i32, i32
  }
  func.func @transform_5(%arg0: i32, %arg1: i32) -> (i32, i32) {
    %c0_i32 = arith.constant 0 : i32
    %c0_i32_0 = arith.constant 0 : i32
    %c0_i32_1 = arith.constant 0 : i32
    return %c0_i32, %c0_i32_0 : i32, i32
  }
  func.func @transform_6(%arg0: i32, %arg1: i32) -> (i32, i32) {
    %c0_i32 = arith.constant 0 : i32
    %c0_i32_0 = arith.constant 0 : i32
    %c0_i32_1 = arith.constant 0 : i32
    return %c0_i32, %c0_i32_0 : i32, i32
  }
  func.func @transform_7(%arg0: i32, %arg1: i32) -> (i32, i32) {
    %c0_i32 = arith.constant 0 : i32
    %c0_i32_0 = arith.constant 0 : i32
    %c0_i32_1 = arith.constant 0 : i32
    return %c0_i32, %c0_i32_0 : i32, i32
  }
  func.func @transform_8(%arg0: i32, %arg1: i32) -> (i32, i32) {
    %c0_i32 = arith.constant 0 : i32
    %c0_i32_0 = arith.constant 0 : i32
    %c0_i32_1 = arith.constant 0 : i32
    return %c0_i32, %c0_i32_0 : i32, i32
  }
  func.func @transform_9(%arg0: i32, %arg1: i32) -> (i32, i32) {
    %c0_i32 = arith.constant 0 : i32
    %c0_i32_0 = arith.constant 0 : i32
    %c0_i32_1 = arith.constant 0 : i32
    return %c0_i32, %c0_i32_0 : i32, i32
  }
  func.func @transform_10(%arg0: i32, %arg1: i32) -> (i32, i32) {
    %c0_i32 = arith.constant 0 : i32
    %c0_i32_0 = arith.constant 0 : i32
    %c0_i32_1 = arith.constant 0 : i32
    return %c0_i32, %c0_i32_0 : i32, i32
  }
  func.func @transform_11(%arg0: i32, %arg1: i32) -> (i32, i32) {
    %c0_i32 = arith.constant 0 : i32
    %c0_i32_0 = arith.constant 0 : i32
    %c0_i32_1 = arith.constant 0 : i32
    return %c0_i32, %c0_i32_0 : i32, i32
  }
  func.func @transform_12(%arg0: i32, %arg1: i32) -> (i32, i32) {
    %c0_i32 = arith.constant 0 : i32
    %c0_i32_0 = arith.constant 0 : i32
    %c0_i32_1 = arith.constant 0 : i32
    return %c0_i32, %c0_i32_0 : i32, i32
  }
  func.func @transform_13(%arg0: i32, %arg1: i32) -> (i32, i32) {
    %c0_i32 = arith.constant 0 : i32
    %c0_i32_0 = arith.constant 0 : i32
    %c0_i32_1 = arith.constant 0 : i32
    return %c0_i32, %c0_i32_0 : i32, i32
  }
  func.func @transform_14(%arg0: i32, %arg1: i32) -> (i32, i32) {
    %c0_i32 = arith.constant 0 : i32
    %c0_i32_0 = arith.constant 0 : i32
    %c0_i32_1 = arith.constant 0 : i32
    return %c0_i32, %c0_i32_0 : i32, i32
  }
  func.func @transform_15(%arg0: i32, %arg1: i32) -> (i32, i32) {
    %c0_i32 = arith.constant 0 : i32
    %c0_i32_0 = arith.constant 0 : i32
    %c0_i32_1 = arith.constant 0 : i32
    return %c0_i32, %c0_i32_0 : i32, i32
  }
  func.func @transform_16(%arg0: i32, %arg1: i32) -> (i32, i32) {
    %c0_i32 = arith.constant 0 : i32
    %c0_i32_0 = arith.constant 0 : i32
    %c0_i32_1 = arith.constant 0 : i32
    return %c0_i32, %c0_i32_0 : i32, i32
  }
  func.func @transform_17(%arg0: i32, %arg1: i32) -> (i32, i32, i32) {
    %c0_i32 = arith.constant 0 : i32
    %c0_i32_0 = arith.constant 0 : i32
    return %arg0, %arg1, %c0_i32 : i32, i32, i32
  }
}

</mosaic_0001>

<llo_original>
// kernel: _lambda_.1
$region0: #{_lambda_.1}
  #allocation0 [shape = 'u32[]', space=smem, size = 0x4, offset = 0x4, fixed_abs, tag = 'smem constant byte address 0x4 - core index']
  #allocation1 [shape = 'u32[72,128]{1,0:T(1,128)}', space=vmem, size = 0x9000, scoped, tag = 'internal scratch']
  #allocation2 [shape = 'bf16[8,64]{1,0:T(8,128)(2,1)}', space=vmem, size = 0x800, scoped, tag = 'scratch operand']
  %s0 = inlined_call_operand.hbm [shape: f32[2,8,32], index: 0, kind: input, shape index: {}, may-alias: {0,1}]
  %s1 = inlined_call_operand.hbm [shape: f32[2,8,32], index: 1, kind: input, shape index: {}, may-alias: {0,1}]
  %s2 = inlined_call_operand.vmem [shape: f32[2,1,8], index: 2, kind: input, shape index: {}]
  %s3 = inlined_call_operand.vmem [shape: f32[1,32], index: 3, kind: input, shape index: {}, may-alias: {3,11}]
  %s4 = inlined_call_operand.vmem [shape: f32[1,32], index: 4, kind: input, shape index: {}, may-alias: {4,12}]
  %s5 = inlined_call_operand.hbm [shape: bf16[32,32], index: 5, kind: input, shape index: {}]
  %s6 = inlined_call_operand.hbm [shape: f32[1,32], index: 6, kind: input, shape index: {}]
  %s7 = inlined_call_operand.hbm [shape: bf16[32,64], index: 7, kind: input, shape index: {}]
  %s8 = inlined_call_operand.hbm [shape: f32[1,64], index: 8, kind: input, shape index: {}]
  %s9 = inlined_call_operand.hbm [shape: bf16[32,32], index: 9, kind: input, shape index: {}]
  %s10 = inlined_call_operand.hbm [shape: f32[1,32], index: 10, kind: input, shape index: {}]
  %s11 = inlined_call_operand.vmem [shape: f32[1,32], index: 11, kind: input, shape index: {}, may-alias: {3,11}]
  %s12 = inlined_call_operand.vmem [shape: f32[1,32], index: 12, kind: input, shape index: {}, may-alias: {4,12}]
  %s13 = inlined_call_operand.vmem [shape: bf16[32,64], index: 13, kind: input, shape index: {}]
  %s14 = inlined_call_operand.vmem [shape: f32[1,64], index: 14, kind: input, shape index: {}]
  %s15 = inlined_call_operand.hbm [shape: bf16[64,32], index: 15, kind: input, shape index: {}]
  %s16 = inlined_call_operand.vmem [shape: f32[1,32], index: 16, kind: input, shape index: {}]
  %s17 = inlined_call_operand.hbm [shape: f32[2,8,32], index: 17, kind: output, shape index: {}]
  %s18 = sld [smem:[#allocation0]]
  $region141: #{_lambda_.1} parent=0
    _
  %s20 = ssub.s32 1, %s18
  %s21 = scalar_select 0, %s20, %s18
  $region1: #{_lambda_.1} parent=0
    #allocation3 [shape = 'u8[8192]{0}', space=vmem, size = 0x2000, scoped, tag = 'input window, operand 0']
    #allocation4 [shape = 's32[2]{0}', space=sflag, size = 0x8, scoped, tag = 'scoped memory for _lambda_.1']
    #allocation5 [shape = 's32[2]{0}', space=sflag, size = 0x8, scoped, tag = 'scoped memory for _lambda_.1']
    #allocation6 [shape = 'u8[8192]{0}', space=vmem, size = 0x2000, scoped, tag = 'input window, operand 1']
    #allocation7 [shape = 's32[2]{0}', space=sflag, size = 0x8, scoped, tag = 'scoped memory for _lambda_.1']
    #allocation8 [shape = 'u8[8192]{0}', space=vmem, size = 0x2000, scoped, tag = 'input window, operand 5, single buffered']
    #allocation9 [shape = 'u8[512]{0}', space=vmem, size = 0x400, scoped, tag = 'input window, operand 6, single buffered']
    #allocation10 [shape = 's32[1]{0}', space=sflag, size = 0x4, scoped, tag = 'scoped memory for _lambda_.1']
    #allocation11 [shape = 'u8[8192]{0}', space=vmem, size = 0x2000, scoped, tag = 'input window, operand 7, single buffered']
    #allocation12 [shape = 'u8[512]{0}', space=vmem, size = 0x400, scoped, tag = 'input window, operand 8, single buffered']
    #allocation13 [shape = 's32[1]{0}', space=sflag, size = 0x4, scoped, tag = 'scoped memory for _lambda_.1']
    #allocation14 [shape = 'u8[8192]{0}', space=vmem, size = 0x2000, scoped, tag = 'input window, operand 9, single buffered']
    #allocation15 [shape = 'u8[512]{0}', space=vmem, size = 0x400, scoped, tag = 'input window, operand 10, single buffered']
    #allocation16 [shape = 's32[1]{0}', space=sflag, size = 0x4, scoped, tag = 'scoped memory for _lambda_.1']
    #allocation17 [shape = 'u8[16384]{0}', space=vmem, size = 0x4000, scoped, tag = 'input window, operand 15, single buffered']
    #allocation18 [shape = 'u8[8192]{0}', space=vmem, size = 0x2000, scoped, tag = 'output window, operand 0']
    %22 = vsyncpa [#allocation4], 0
    %s23 = scalar_lea.sflag [#allocation4], 1
    %24 = vsyncpa %s23, 0
    %25 = vsyncpa [#allocation7], 0
    %s26 = scalar_lea.sflag [#allocation7], 1
    %27 = vsyncpa %s26, 0
    %28 = vsyncpa [#allocation10], 0
    %29 = vsyncpa [#allocation13], 0
    %30 = vsyncpa [#allocation16], 0
    %31 = vsyncpa [#allocation5], 0
    %s32 = scalar_lea.sflag [#allocation5], 1
    %33 = vsyncpa %s32, 0
    loop: start=0, step=1, limit=4
    $region2: #{_lambda_.1} parent=1 // loop_pre_header
      _
    $region3: #{_lambda_.1} parent=1 // loop_header
      %s35 = sphi 0, %s39
      %p36 = scmp.ge.s32.totalorder %s35, 4
      %s42 = sphi 0, %s54
      %s43 = sphi 0, %s50
      %s44 = sphi 0, %s42
      %s45 = sphi 0, %s43
      %s46 = sphi 0, %s44
      %s47 = sphi 0, %s45
      %s59 = sphi 0, %s61
      %s62 = sphi 0, %s59
      %s63 = sphi 0, %s62
      %s79 = sphi 0, %s63
      %s85 = sphi 0, %s87
      %s88 = sphi 0, %s85
      %s89 = sphi 0, %s88
      %s105 = sphi 0, %s89
      %s111 = sphi 0, %s113
      %s114 = sphi 0, %s111
      %s115 = sphi 0, %s114
      %s131 = sphi 0, %s115
      %s135 = sphi 0, %s135
      %s137 = sphi 0, %s135
      %s138 = sphi 0, %s137
      %s152 = sphi 0, %s138
      %s156 = sphi 0, %s156
      %s158 = sphi 0, %s156
      %s159 = sphi 0, %s158
      %s173 = sphi 0, %s159
      %s177 = sphi 0, %s177
      %s179 = sphi 0, %s177
      %s180 = sphi 0, %s179
      %s194 = sphi 0, %s180
      %s198 = sphi 0, %s198
      %s200 = sphi 0, %s198
      %s201 = sphi 0, %s200
      %s215 = sphi 0, %s201
      %s219 = sphi 0, %s219
      %s221 = sphi 0, %s219
      %s222 = sphi 0, %s221
      %s236 = sphi 0, %s222
      %s240 = sphi 0, %s240
      %s242 = sphi 0, %s240
      %s243 = sphi 0, %s242
      %s257 = sphi 0, %s243
      %s261 = sphi 0, %s261
      %s263 = sphi 0, %s261
      %s264 = sphi 0, %s263
      %s278 = sphi 0, %s264
      %s282 = sphi 0, %s282
      %s284 = sphi 0, %s282
      %s285 = sphi 0, %s284
      %s299 = sphi 0, %s285
      %s303 = sphi 0, %s303
      %s305 = sphi 0, %s303
      %s306 = sphi 0, %s305
      %s320 = sphi 0, %s306
      %s324 = sphi 0, %s324
      %s326 = sphi 0, %s324
      %s327 = sphi 0, %s326
      %s341 = sphi 0, %s327
      %s345 = sphi 0, %s345
      %s347 = sphi 0, %s345
      %s348 = sphi 0, %s347
      %s362 = sphi 0, %s348
      %s366 = sphi 0, %s366
      %s368 = sphi 0, %s366
      %s369 = sphi 0, %s368
      %s383 = sphi 0, %s369
      %s387 = sphi 0, %s387
      %s389 = sphi 0, %s387
      %s390 = sphi 0, %s389
      %s404 = sphi 0, %s390
      %s408 = sphi 0, %s408
      %s410 = sphi 0, %s408
      %s411 = sphi 0, %s410
      %s425 = sphi 0, %s411
      %s433 = sphi 0, %s435
      %s436 = sphi 0, %s433
      %s437 = sphi 0, %s436
      %s453 = sphi 0, %s437
    $region4: #{_lambda_.1} parent=1 // loop_header_branch
      %38 = sbr.rel (%p36) target = $region8
    $region5: #{_lambda_.1} parent=1 // loop_body
      %s40 = ssub.s32 %s35, 1
      %s41 = ssub.s32 %s35, 2
      %s48 = sadd.s32 1, %s43
      %p49 = scmp.ge.s32.totalorder %s48, 1
      %s50 = scalar_select %p49, 0, %s48
      %s51 = sadd.s32 1, %s42
      %s52 = scalar_select %p49, %s51, %s42
      %p53 = scmp.ge.s32.totalorder %s52, 2
      %s54 = scalar_select %p53, 0, %s52
      %s55 = ssub.s32 %s42, %s54
      %s56 = ssub.s32 %s43, %s50
      %s57 = sor.u32 %s55, %s56
      %p58 = scmp.eq.s32.totalorder %s57, 0
      %s60 = sadd.s32 %s59, 1
      %s61 = scalar_select %p58, %s59, %s60
      %p64 = pneg %p58
      %p65 = scmp.eq.s32.totalorder %s35, 1
      %p66 = por %p64, %p65
      %p67 = scmp.ne.s32.totalorder %s59, %s62
      %p68 = scmp.eq.s32.totalorder %s35, 0
      %p69 = por %p67, %p68
      %p70 = scmp.ne.s32.totalorder %s59, %s62
      %p71 = scmp.eq.s32.totalorder %s40, 1
      %p72 = por %p70, %p71
      %p73 = scmp.ne.s32.totalorder %s62, %s63
      %p74 = scmp.eq.s32.totalorder %s40, 0
      %p75 = por %p73, %p74
      %p76 = scmp.ne.s32.totalorder %s62, %s63
      %p77 = scmp.eq.s32.totalorder %s41, 1
      %p78 = por %p76, %p77
      %p80 = scmp.ne.s32.totalorder %s63, %s79
      %p81 = scmp.eq.s32.totalorder %s41, 0
      %p82 = por %p80, %p81
      %s83 = ssub.s32 %s42, %s54
      %p84 = scmp.eq.s32.totalorder %s83, 0
      %s86 = sadd.s32 %s85, 1
      %s87 = scalar_select %p84, %s85, %s86
      %p90 = pneg %p84
      %p91 = scmp.eq.s32.totalorder %s35, 1
      %p92 = por %p90, %p91
      %p93 = scmp.ne.s32.totalorder %s85, %s88
      %p94 = scmp.eq.s32.totalorder %s35, 0
      %p95 = por %p93, %p94
      %p96 = scmp.ne.s32.totalorder %s85, %s88
      %p97 = scmp.eq.s32.totalorder %s40, 1
      %p98 = por %p96, %p97
      %p99 = scmp.ne.s32.totalorder %s88, %s89
      %p100 = scmp.eq.s32.totalorder %s40, 0
      %p101 = por %p99, %p100
      %p102 = scmp.ne.s32.totalorder %s88, %s89
      %p103 = scmp.eq.s32.totalorder %s41, 1
      %p104 = por %p102, %p103
      %p106 = scmp.ne.s32.totalorder %s89, %s105
      %p107 = scmp.eq.s32.totalorder %s41, 0
      %p108 = por %p106, %p107
      %s109 = ssub.s32 %s42, %s54
      %p110 = scmp.eq.s32.totalorder %s109, 0
      %s112 = sadd.s32 %s111, 1
      %s113 = scalar_select %p110, %s111, %s112
      %p116 = pneg %p110
      %p117 = scmp.eq.s32.totalorder %s35, 1
      %p118 = por %p116, %p117
      %p119 = scmp.ne.s32.totalorder %s111, %s114
      %p120 = scmp.eq.s32.totalorder %s35, 0
      %p121 = por %p119, %p120
      %p122 = scmp.ne.s32.totalorder %s111, %s114
      %p123 = scmp.eq.s32.totalorder %s40, 1
      %p124 = por %p122, %p123
      %p125 = scmp.ne.s32.totalorder %s114, %s115
      %p126 = scmp.eq.s32.totalorder %s40, 0
      %p127 = por %p125, %p126
      %p128 = scmp.ne.s32.totalorder %s114, %s115
      %p129 = scmp.eq.s32.totalorder %s41, 1
      %p130 = por %p128, %p129
      %p132 = scmp.ne.s32.totalorder %s115, %s131
      %p133 = scmp.eq.s32.totalorder %s41, 0
      %p134 = por %p132, %p133
      %s136 = sadd.s32 %s135, 1
      %p139 = scmp.eq.s32.totalorder %s35, 1
      %p140 = scmp.ne.s32.totalorder %s135, %s137
      %p141 = scmp.eq.s32.totalorder %s35, 0
      %p142 = por %p140, %p141
      %p143 = scmp.ne.s32.totalorder %s135, %s137
      %p144 = scmp.eq.s32.totalorder %s40, 1
      %p145 = por %p143, %p144
      %p146 = scmp.ne.s32.totalorder %s137, %s138
      %p147 = scmp.eq.s32.totalorder %s40, 0
      %p148 = por %p146, %p147
      %p149 = scmp.ne.s32.totalorder %s137, %s138
      %p150 = scmp.eq.s32.totalorder %s41, 1
      %p151 = por %p149, %p150
      %p153 = scmp.ne.s32.totalorder %s138, %s152
      %p154 = scmp.eq.s32.totalorder %s41, 0
      %p155 = por %p153, %p154
      %s157 = sadd.s32 %s156, 1
      %p160 = scmp.eq.s32.totalorder %s35, 1
      %p161 = scmp.ne.s32.totalorder %s156, %s158
      %p162 = scmp.eq.s32.totalorder %s35, 0
      %p163 = por %p161, %p162
      %p164 = scmp.ne.s32.totalorder %s156, %s158
      %p165 = scmp.eq.s32.totalorder %s40, 1
      %p166 = por %p164, %p165
      %p167 = scmp.ne.s32.totalorder %s158, %s159
      %p168 = scmp.eq.s32.totalorder %s40, 0
      %p169 = por %p167, %p168
      %p170 = scmp.ne.s32.totalorder %s158, %s159
      %p171 = scmp.eq.s32.totalorder %s41, 1
      %p172 = por %p170, %p171
      %p174 = scmp.ne.s32.totalorder %s159, %s173
      %p175 = scmp.eq.s32.totalorder %s41, 0
      %p176 = por %p174, %p175
      %s178 = sadd.s32 %s177, 1
      %p181 = scmp.eq.s32.totalorder %s35, 1
      %p182 = scmp.ne.s32.totalorder %s177, %s179
      %p183 = scmp.eq.s32.totalorder %s35, 0
      %p184 = por %p182, %p183
      %p185 = scmp.ne.s32.totalorder %s177, %s179
      %p186 = scmp.eq.s32.totalorder %s40, 1
      %p187 = por %p185, %p186
      %p188 = scmp.ne.s32.totalorder %s179, %s180
      %p189 = scmp.eq.s32.totalorder %s40, 0
      %p190 = por %p188, %p189
      %p191 = scmp.ne.s32.totalorder %s179, %s180
      %p192 = scmp.eq.s32.totalorder %s41, 1
      %p193 = por %p191, %p192
      %p195 = scmp.ne.s32.totalorder %s180, %s194
      %p196 = scmp.eq.s32.totalorder %s41, 0
      %p197 = por %p195, %p196
      %s199 = sadd.s32 %s198, 1
      %p202 = scmp.eq.s32.totalorder %s35, 1
      %p203 = scmp.ne.s32.totalorder %s198, %s200
      %p204 = scmp.eq.s32.totalorder %s35, 0
      %p205 = por %p203, %p204
      %p206 = scmp.ne.s32.totalorder %s198, %s200
      %p207 = scmp.eq.s32.totalorder %s40, 1
      %p208 = por %p206, %p207
      %p209 = scmp.ne.s32.totalorder %s200, %s201
      %p210 = scmp.eq.s32.totalorder %s40, 0
      %p211 = por %p209, %p210
      %p212 = scmp.ne.s32.totalorder %s200, %s201
      %p213 = scmp.eq.s32.totalorder %s41, 1
      %p214 = por %p212, %p213
      %p216 = scmp.ne.s32.totalorder %s201, %s215
      %p217 = scmp.eq.s32.totalorder %s41, 0
      %p218 = por %p216, %p217
      %s220 = sadd.s32 %s219, 1
      %p223 = scmp.eq.s32.totalorder %s35, 1
      %p224 = scmp.ne.s32.totalorder %s219, %s221
      %p225 = scmp.eq.s32.totalorder %s35, 0
      %p226 = por %p224, %p225
      %p227 = scmp.ne.s32.totalorder %s219, %s221
      %p228 = scmp.eq.s32.totalorder %s40, 1
      %p229 = por %p227, %p228
      %p230 = scmp.ne.s32.totalorder %s221, %s222
      %p231 = scmp.eq.s32.totalorder %s40, 0
      %p232 = por %p230, %p231
      %p233 = scmp.ne.s32.totalorder %s221, %s222
      %p234 = scmp.eq.s32.totalorder %s41, 1
      %p235 = por %p233, %p234
      %p237 = scmp.ne.s32.totalorder %s222, %s236
      %p238 = scmp.eq.s32.totalorder %s41, 0
      %p239 = por %p237, %p238
      %s241 = sadd.s32 %s240, 1
      %p244 = scmp.eq.s32.totalorder %s35, 1
      %p245 = scmp.ne.s32.totalorder %s240, %s242
      %p246 = scmp.eq.s32.totalorder %s35, 0
      %p247 = por %p245, %p246
      %p248 = scmp.ne.s32.totalorder %s240, %s242
      %p249 = scmp.eq.s32.totalorder %s40, 1
      %p250 = por %p248, %p249
      %p251 = scmp.ne.s32.totalorder %s242, %s243
      %p252 = scmp.eq.s32.totalorder %s40, 0
      %p253 = por %p251, %p252
      %p254 = scmp.ne.s32.totalorder %s242, %s243
      %p255 = scmp.eq.s32.totalorder %s41, 1
      %p256 = por %p254, %p255
      %p258 = scmp.ne.s32.totalorder %s243, %s257
      %p259 = scmp.eq.s32.totalorder %s41, 0
      %p260 = por %p258, %p259
      %s262 = sadd.s32 %s261, 1
      %p265 = scmp.eq.s32.totalorder %s35, 1
      %p266 = scmp.ne.s32.totalorder %s261, %s263
      %p267 = scmp.eq.s32.totalorder %s35, 0
      %p268 = por %p266, %p267
      %p269 = scmp.ne.s32.totalorder %s261, %s263
      %p270 = scmp.eq.s32.totalorder %s40, 1
      %p271 = por %p269, %p270
      %p272 = scmp.ne.s32.totalorder %s263, %s264
      %p273 = scmp.eq.s32.totalorder %s40, 0
      %p274 = por %p272, %p273
      %p275 = scmp.ne.s32.totalorder %s263, %s264
      %p276 = scmp.eq.s32.totalorder %s41, 1
      %p277 = por %p275, %p276
      %p279 = scmp.ne.s32.totalorder %s264, %s278
      %p280 = scmp.eq.s32.totalorder %s41, 0
      %p281 = por %p279, %p280
      %s283 = sadd.s32 %s282, 1
      %p286 = scmp.eq.s32.totalorder %s35, 1
      %p287 = scmp.ne.s32.totalorder %s282, %s284
      %p288 = scmp.eq.s32.totalorder %s35, 0
      %p289 = por %p287, %p288
      %p290 = scmp.ne.s32.totalorder %s282, %s284
      %p291 = scmp.eq.s32.totalorder %s40, 1
      %p292 = por %p290, %p291
      %p293 = scmp.ne.s32.totalorder %s284, %s285
      %p294 = scmp.eq.s32.totalorder %s40, 0
      %p295 = por %p293, %p294
      %p296 = scmp.ne.s32.totalorder %s284, %s285
      %p297 = scmp.eq.s32.totalorder %s41, 1
      %p298 = por %p296, %p297
      %p300 = scmp.ne.s32.totalorder %s285, %s299
      %p301 = scmp.eq.s32.totalorder %s41, 0
      %p302 = por %p300, %p301
      %s304 = sadd.s32 %s303, 1
      %p307 = scmp.eq.s32.totalorder %s35, 1
      %p308 = scmp.ne.s32.totalorder %s303, %s305
      %p309 = scmp.eq.s32.totalorder %s35, 0
      %p310 = por %p308, %p309
      %p311 = scmp.ne.s32.totalorder %s303, %s305
      %p312 = scmp.eq.s32.totalorder %s40, 1
      %p313 = por %p311, %p312
      %p314 = scmp.ne.s32.totalorder %s305, %s306
      %p315 = scmp.eq.s32.totalorder %s40, 0
      %p316 = por %p314, %p315
      %p317 = scmp.ne.s32.totalorder %s305, %s306
      %p318 = scmp.eq.s32.totalorder %s41, 1
      %p319 = por %p317, %p318
      %p321 = scmp.ne.s32.totalorder %s306, %s320
      %p322 = scmp.eq.s32.totalorder %s41, 0
      %p323 = por %p321, %p322
      %s325 = sadd.s32 %s324, 1
      %p328 = scmp.eq.s32.totalorder %s35, 1
      %p329 = scmp.ne.s32.totalorder %s324, %s326
      %p330 = scmp.eq.s32.totalorder %s35, 0
      %p331 = por %p329, %p330
      %p332 = scmp.ne.s32.totalorder %s324, %s326
      %p333 = scmp.eq.s32.totalorder %s40, 1
      %p334 = por %p332, %p333
      %p335 = scmp.ne.s32.totalorder %s326, %s327
      %p336 = scmp.eq.s32.totalorder %s40, 0
      %p337 = por %p335, %p336
      %p338 = scmp.ne.s32.totalorder %s326, %s327
      %p339 = scmp.eq.s32.totalorder %s41, 1
      %p340 = por %p338, %p339
      %p342 = scmp.ne.s32.totalorder %s327, %s341
      %p343 = scmp.eq.s32.totalorder %s41, 0
      %p344 = por %p342, %p343
      %s346 = sadd.s32 %s345, 1
      %p349 = scmp.eq.s32.totalorder %s35, 1
      %p350 = scmp.ne.s32.totalorder %s345, %s347
      %p351 = scmp.eq.s32.totalorder %s35, 0
      %p352 = por %p350, %p351
      %p353 = scmp.ne.s32.totalorder %s345, %s347
      %p354 = scmp.eq.s32.totalorder %s40, 1
      %p355 = por %p353, %p354
      %p356 = scmp.ne.s32.totalorder %s347, %s348
      %p357 = scmp.eq.s32.totalorder %s40, 0
      %p358 = por %p356, %p357
      %p359 = scmp.ne.s32.totalorder %s347, %s348
      %p360 = scmp.eq.s32.totalorder %s41, 1
      %p361 = por %p359, %p360
      %p363 = scmp.ne.s32.totalorder %s348, %s362
      %p364 = scmp.eq.s32.totalorder %s41, 0
      %p365 = por %p363, %p364
      %s367 = sadd.s32 %s366, 1
      %p370 = scmp.eq.s32.totalorder %s35, 1
      %p371 = scmp.ne.s32.totalorder %s366, %s368
      %p372 = scmp.eq.s32.totalorder %s35, 0
      %p373 = por %p371, %p372
      %p374 = scmp.ne.s32.totalorder %s366, %s368
      %p375 = scmp.eq.s32.totalorder %s40, 1
      %p376 = por %p374, %p375
      %p377 = scmp.ne.s32.totalorder %s368, %s369
      %p378 = scmp.eq.s32.totalorder %s40, 0
      %p379 = por %p377, %p378
      %p380 = scmp.ne.s32.totalorder %s368, %s369
      %p381 = scmp.eq.s32.totalorder %s41, 1
      %p382 = por %p380, %p381
      %p384 = scmp.ne.s32.totalorder %s369, %s383
      %p385 = scmp.eq.s32.totalorder %s41, 0
      %p386 = por %p384, %p385
      %s388 = sadd.s32 %s387, 1
      %p391 = scmp.eq.s32.totalorder %s35, 1
      %p392 = scmp.ne.s32.totalorder %s387, %s389
      %p393 = scmp.eq.s32.totalorder %s35, 0
      %p394 = por %p392, %p393
      %p395 = scmp.ne.s32.totalorder %s387, %s389
      %p396 = scmp.eq.s32.totalorder %s40, 1
      %p397 = por %p395, %p396
      %p398 = scmp.ne.s32.totalorder %s389, %s390
      %p399 = scmp.eq.s32.totalorder %s40, 0
      %p400 = por %p398, %p399
      %p401 = scmp.ne.s32.totalorder %s389, %s390
      %p402 = scmp.eq.s32.totalorder %s41, 1
      %p403 = por %p401, %p402
      %p405 = scmp.ne.s32.totalorder %s390, %s404
      %p406 = scmp.eq.s32.totalorder %s41, 0
      %p407 = por %p405, %p406
      %s409 = sadd.s32 %s408, 1
      %p412 = scmp.eq.s32.totalorder %s35, 1
      %p413 = scmp.ne.s32.totalorder %s408, %s410
      %p414 = scmp.eq.s32.totalorder %s35, 0
      %p415 = por %p413, %p414
      %p416 = scmp.ne.s32.totalorder %s408, %s410
      %p417 = scmp.eq.s32.totalorder %s40, 1
      %p418 = por %p416, %p417
      %p419 = scmp.ne.s32.totalorder %s410, %s411
      %p420 = scmp.eq.s32.totalorder %s40, 0
      %p421 = por %p419, %p420
      %p422 = scmp.ne.s32.totalorder %s410, %s411
      %p423 = scmp.eq.s32.totalorder %s41, 1
      %p424 = por %p422, %p423
      %p426 = scmp.ne.s32.totalorder %s411, %s425
      %p427 = scmp.eq.s32.totalorder %s41, 0
      %p428 = por %p426, %p427
      %s429 = ssub.s32 %s42, %s54
      %s430 = ssub.s32 %s43, %s50
      %s431 = sor.u32 %s429, %s430
      %p432 = scmp.eq.s32.totalorder %s431, 0
      %s434 = sadd.s32 %s433, 1
      %s435 = scalar_select %p432, %s433, %s434
      %p438 = pneg %p432
      %p439 = scmp.eq.s32.totalorder %s35, 1
      %p440 = por %p438, %p439
      %p441 = scmp.ne.s32.totalorder %s433, %s436
      %p442 = scmp.eq.s32.totalorder %s35, 0
      %p443 = por %p441, %p442
      %p444 = scmp.ne.s32.totalorder %s433, %s436
      %p445 = scmp.eq.s32.totalorder %s40, 1
      %p446 = por %p444, %p445
      %p447 = scmp.ne.s32.totalorder %s436, %s437
      %p448 = scmp.eq.s32.totalorder %s40, 0
      %p449 = por %p447, %p448
      %p450 = scmp.ne.s32.totalorder %s436, %s437
      %p451 = scmp.eq.s32.totalorder %s41, 1
      %p452 = por %p450, %p451
      %p454 = scmp.ne.s32.totalorder %s437, %s453
      %p455 = scmp.eq.s32.totalorder %s41, 0
      %p456 = por %p454, %p455
      %p457 = scmp.le.s32.totalorder 1, %s35
      %p458 = scmp.lt.s32.totalorder %s35, 3
      %p459 = pnand %p457, %p458
      %p460 = pneg %p459
      // Predicated region
      $region9: #{_lambda_.1} parent=5 // pred_check
        _
      $region10: #{_lambda_.1} parent=5 // pred_check_branch
        %462 = sbr.rel (%p459) target = $region12
      $region11: #{_lambda_.1} parent=5 // pred_region
        %s463 = ssub.s32 %s35, 1
        // Predicated region
        $region13: #{_lambda_.1} parent=11 // pred_check
          %p464 = pneg %p148
        $region14: #{_lambda_.1} parent=11 // pred_check_branch
          %466 = sbr.rel (%p464) target = $region16
        $region15: #{_lambda_.1} parent=11 // pred_region
          _
        $region16: #{_lambda_.1} parent=11 // pred_fallthru
          _
        // Predicated region
        $region17: #{_lambda_.1} parent=11 // pred_check
          %p467 = pneg %p169
        $region18: #{_lambda_.1} parent=11 // pred_check_branch
          %469 = sbr.rel (%p467) target = $region20
        $region19: #{_lambda_.1} parent=11 // pred_region
          _
        $region20: #{_lambda_.1} parent=11 // pred_fallthru
          _
        // Predicated region
        $region21: #{_lambda_.1} parent=11 // pred_check
          %p470 = pneg %p190
        $region22: #{_lambda_.1} parent=11 // pred_check_branch
          %472 = sbr.rel (%p470) target = $region24
        $region23: #{_lambda_.1} parent=11 // pred_region
          %474 = vsyncadd [#allocation7], 0
          %s475 = sshll.u32 %s5, 4
          %s476 = int_to_ptr.hbm [resolvable:$true] %s475
          %s477 = sshll.u32 [#allocation8], 4
          %s478 = int_to_ptr.vmem [resolvable:$true] %s477
          %483 = dma.hbm_to_vmem [thread:$0]  %s476, 256, %s478, [#allocation7], 64, 64, 4
        $region24: #{_lambda_.1} parent=11 // pred_fallthru
          _
        // Predicated region
        $region25: #{_lambda_.1} parent=11 // pred_check
          %p484 = pneg %p211
        $region26: #{_lambda_.1} parent=11 // pred_check_branch
          %486 = sbr.rel (%p484) target = $region28
        $region27: #{_lambda_.1} parent=11 // pred_region
          %488 = vsyncadd [#allocation10], 0
          %s490 = sshll.u32 %s6, 4
          %s491 = int_to_ptr.hbm [resolvable:$true] %s490
          %s492 = sshll.u32 [#allocation9], 4
          %s493 = int_to_ptr.vmem [resolvable:$true] %s492
          %495 = dma.hbm_to_vmem [thread:$0]  %s491, 16, %s493, [#allocation10]
        $region28: #{_lambda_.1} parent=11 // pred_fallthru
          _
        // Predicated region
        $region29: #{_lambda_.1} parent=11 // pred_check
          %p496 = pneg %p232
        $region30: #{_lambda_.1} parent=11 // pred_check_branch
          %498 = sbr.rel (%p496) target = $region32
        $region31: #{_lambda_.1} parent=11 // pred_region
          %500 = vsyncadd [#allocation10], 0
          %s501 = sshll.u32 %s7, 4
          %s502 = int_to_ptr.hbm [resolvable:$true] %s501
          %s503 = sshll.u32 [#allocation11], 4
          %s504 = int_to_ptr.vmem [resolvable:$true] %s503
          %509 = dma.hbm_to_vmem [thread:$0]  %s502, 256, %s504, [#allocation10], 64, 64, 4
        $region32: #{_lambda_.1} parent=11 // pred_fallthru
          _
        // Predicated region
        $region33: #{_lambda_.1} parent=11 // pred_check
          %p510 = pneg %p253
        $region34: #{_lambda_.1} parent=11 // pred_check_branch
          %512 = sbr.rel (%p510) target = $region36
        $region35: #{_lambda_.1} parent=11 // pred_region
          %514 = vsyncadd [#allocation13], 0
          %s516 = sshll.u32 %s8, 4
          %s517 = int_to_ptr.hbm [resolvable:$true] %s516
          %s518 = sshll.u32 [#allocation12], 4
          %s519 = int_to_ptr.vmem [resolvable:$true] %s518
          %521 = dma.hbm_to_vmem [thread:$0]  %s517, 16, %s519, [#allocation13]
        $region36: #{_lambda_.1} parent=11 // pred_fallthru
          _
        // Predicated region
        $region37: #{_lambda_.1} parent=11 // pred_check
          %p522 = pneg %p274
        $region38: #{_lambda_.1} parent=11 // pred_check_branch
          %524 = sbr.rel (%p522) target = $region40
        $region39: #{_lambda_.1} parent=11 // pred_region
          %526 = vsyncadd [#allocation13], 0
          %s527 = sshll.u32 %s9, 4
          %s528 = int_to_ptr.hbm [resolvable:$true] %s527
          %s529 = sshll.u32 [#allocation14], 4
          %s530 = int_to_ptr.vmem [resolvable:$true] %s529
          %535 = dma.hbm_to_vmem [thread:$0]  %s528, 256, %s530, [#allocation13], 64, 64, 4
        $region40: #{_lambda_.1} parent=11 // pred_fallthru
          _
        // Predicated region
        $region41: #{_lambda_.1} parent=11 // pred_check
          %p536 = pneg %p295
        $region42: #{_lambda_.1} parent=11 // pred_check_branch
          %538 = sbr.rel (%p536) target = $region44
        $region43: #{_lambda_.1} parent=11 // pred_region
          %540 = vsyncadd [#allocation16], 0
          %s542 = sshll.u32 %s10, 4
          %s543 = int_to_ptr.hbm [resolvable:$true] %s542
          %s544 = sshll.u32 [#allocation15], 4
          %s545 = int_to_ptr.vmem [resolvable:$true] %s544
          %547 = dma.hbm_to_vmem [thread:$0]  %s543, 16, %s545, [#allocation16]
        $region44: #{_lambda_.1} parent=11 // pred_fallthru
          _
        // Predicated region
        $region45: #{_lambda_.1} parent=11 // pred_check
          %p548 = pneg %p316
        $region46: #{_lambda_.1} parent=11 // pred_check_branch
          %550 = sbr.rel (%p548) target = $region48
        $region47: #{_lambda_.1} parent=11 // pred_region
          _
        $region48: #{_lambda_.1} parent=11 // pred_fallthru
          _
        // Predicated region
        $region49: #{_lambda_.1} parent=11 // pred_check
          %p551 = pneg %p337
        $region50: #{_lambda_.1} parent=11 // pred_check_branch
          %553 = sbr.rel (%p551) target = $region52
        $region51: #{_lambda_.1} parent=11 // pred_region
          _
        $region52: #{_lambda_.1} parent=11 // pred_fallthru
          _
        // Predicated region
        $region53: #{_lambda_.1} parent=11 // pred_check
          %p554 = pneg %p358
        $region54: #{_lambda_.1} parent=11 // pred_check_branch
          %556 = sbr.rel (%p554) target = $region56
        $region55: #{_lambda_.1} parent=11 // pred_region
          _
        $region56: #{_lambda_.1} parent=11 // pred_fallthru
          _
        // Predicated region
        $region57: #{_lambda_.1} parent=11 // pred_check
          %p557 = pneg %p379
        $region58: #{_lambda_.1} parent=11 // pred_check_branch
          %559 = sbr.rel (%p557) target = $region60
        $region59: #{_lambda_.1} parent=11 // pred_region
          _
        $region60: #{_lambda_.1} parent=11 // pred_fallthru
          _
        // Predicated region
        $region61: #{_lambda_.1} parent=11 // pred_check
          %p560 = pneg %p400
        $region62: #{_lambda_.1} parent=11 // pred_check_branch
          %562 = sbr.rel (%p560) target = $region64
        $region63: #{_lambda_.1} parent=11 // pred_region
          %564 = vsyncadd [#allocation16], 0
          %s565 = sshll.u32 %s15, 4
          %s566 = int_to_ptr.hbm [resolvable:$true] %s565
          %s567 = sshll.u32 [#allocation17], 4
          %s568 = int_to_ptr.vmem [resolvable:$true] %s567
          %573 = dma.hbm_to_vmem [thread:$0]  %s566, 512, %s568, [#allocation16], 64, 64, 4
        $region64: #{_lambda_.1} parent=11 // pred_fallthru
          _
        // Predicated region
        $region65: #{_lambda_.1} parent=11 // pred_check
          %p574 = pneg %p421
        $region66: #{_lambda_.1} parent=11 // pred_check_branch
          %576 = sbr.rel (%p574) target = $region68
        $region67: #{_lambda_.1} parent=11 // pred_region
          _
        $region68: #{_lambda_.1} parent=11 // pred_fallthru
          _
      $region12: #{_lambda_.1} parent=5 // pred_fallthru
        _
      %p577 = scmp.lt.s32.totalorder %s35, 2
      // Predicated region
      $region69: #{_lambda_.1} parent=5 // pred_check
        %p578 = pneg %p577
      $region70: #{_lambda_.1} parent=5 // pred_check_branch
        %580 = sbr.rel (%p578) target = $region72
      $region71: #{_lambda_.1} parent=5 // pred_region
        // Predicated region
        $region73: #{_lambda_.1} parent=71 // pred_check
          %p581 = pneg %p69
        $region74: #{_lambda_.1} parent=71 // pred_check_branch
          %583 = sbr.rel (%p581) target = $region76
        $region75: #{_lambda_.1} parent=71 // pred_region
          %s584 = sand.u32 %s59, 1
          %s585 = scalar_lea.sflag [#allocation4], %s584
          %s586 = sand.u32 %s59, 1
          %s587 = smul.addr %s586, 8
          %s588 = scalar_lea.vmem [#allocation3], %s587
          %590 = vsyncadd %s585, 0
          %s591 = sadd.s32 %s43, %s42
          %s592 = smul.addr %s591, 8
          %s593 = scalar_lea.hbm %s0, %s592
          %s595 = sshll.u32 %s593, 4
          %s596 = int_to_ptr.hbm [resolvable:$true] %s595
          %s597 = sshll.u32 %s588, 4
          %s598 = int_to_ptr.vmem [resolvable:$true] %s597
          %600 = dma.hbm_to_vmem [thread:$0]  %s596, 128, %s598, %s585
        $region76: #{_lambda_.1} parent=71 // pred_fallthru
          _
        // Predicated region
        $region77: #{_lambda_.1} parent=71 // pred_check
          %p601 = pneg %p95
        $region78: #{_lambda_.1} parent=71 // pred_check_branch
          %603 = sbr.rel (%p601) target = $region80
        $region79: #{_lambda_.1} parent=71 // pred_region
          %s604 = sand.u32 %s35, 1
          %s605 = scalar_lea.sflag [#allocation7], %s604
          %s606 = sand.u32 %s85, 1
          %s607 = smul.addr %s606, 8
          %s608 = scalar_lea.vmem [#allocation6], %s607
          %610 = vsyncadd %s605, 0
          %s611 = smul.addr %s42, 8
          %s612 = scalar_lea.hbm %s1, %s611
          %s614 = sshll.u32 %s612, 4
          %s615 = int_to_ptr.hbm [resolvable:$true] %s614
          %s616 = sshll.u32 %s608, 4
          %s617 = int_to_ptr.vmem [resolvable:$true] %s616
          %619 = dma.hbm_to_vmem [thread:$0]  %s615, 128, %s617, %s605
        $region80: #{_lambda_.1} parent=71 // pred_fallthru
          _
        // Predicated region
        $region81: #{_lambda_.1} parent=71 // pred_check
          %p620 = pneg %p121
        $region82: #{_lambda_.1} parent=71 // pred_check_branch
          %622 = sbr.rel (%p620) target = $region84
        $region83: #{_lambda_.1} parent=71 // pred_region
          %p623 = scmp.lt.s32.totalorder %s42, 1
          %s624 = scalar_select %p623, %s42, 1
          %s625 = scalar_lea.vmem %s2, %s624
        $region84: #{_lambda_.1} parent=71 // pred_fallthru
          _
      $region72: #{_lambda_.1} parent=5 // pred_fallthru
        _
      %p626 = scmp.le.s32.totalorder 1, %s35
      %p627 = scmp.lt.s32.totalorder %s35, 3
      %p628 = pnand %p626, %p627
      %p629 = pneg %p628
      // Predicated region
      $region85: #{_lambda_.1} parent=5 // pred_check
        _
      $region86: #{_lambda_.1} parent=5 // pred_check_branch
        %631 = sbr.rel (%p628) target = $region88
      $region87: #{_lambda_.1} parent=5 // pred_region
        %s632 = ssub.s32 %s35, 1
        %s633 = sand.u32 %s62, 1
        %s634 = scalar_lea.sflag [#allocation4], %s633
        %s635 = sand.u32 %s62, 1
        %s636 = smul.addr %s635, 8
        %s637 = scalar_lea.vmem [#allocation3], %s636
        // Predicated region
        $region89: #{_lambda_.1} parent=87 // pred_check
          %p638 = pneg %p75
        $region90: #{_lambda_.1} parent=87 // pred_check_branch
          %640 = sbr.rel (%p638) target = $region92
        $region91: #{_lambda_.1} parent=87 // pred_region
          %642 = dma.done %s634, 128
        $region92: #{_lambda_.1} parent=87 // pred_fallthru
          _
        %s643 = sand.u32 %s40, 1
        %s644 = scalar_lea.sflag [#allocation7], %s643
        %s645 = sand.u32 %s88, 1
        %s646 = smul.addr %s645, 8
        %s647 = scalar_lea.vmem [#allocation6], %s646
        // Predicated region
        $region93: #{_lambda_.1} parent=87 // pred_check
          %p648 = pneg %p101
        $region94: #{_lambda_.1} parent=87 // pred_check_branch
          %650 = sbr.rel (%p648) target = $region96
        $region95: #{_lambda_.1} parent=87 // pred_region
          %652 = dma.done %s644, 128
        $region96: #{_lambda_.1} parent=87 // pred_fallthru
          _
        // Predicated region
        $region97: #{_lambda_.1} parent=87 // pred_check
          %p653 = pneg %p190
        $region98: #{_lambda_.1} parent=87 // pred_check_branch
          %655 = sbr.rel (%p653) target = $region100
        $region99: #{_lambda_.1} parent=87 // pred_region
          %657 = dma.done [#allocation7], 256
        $region100: #{_lambda_.1} parent=87 // pred_fallthru
          _
        // Predicated region
        $region101: #{_lambda_.1} parent=87 // pred_check
          %p658 = pneg %p211
        $region102: #{_lambda_.1} parent=87 // pred_check_branch
          %660 = sbr.rel (%p658) target = $region104
        $region103: #{_lambda_.1} parent=87 // pred_region
          %662 = dma.done [#allocation10], 16
        $region104: #{_lambda_.1} parent=87 // pred_fallthru
          _
        // Predicated region
        $region105: #{_lambda_.1} parent=87 // pred_check
          %p663 = pneg %p232
        $region106: #{_lambda_.1} parent=87 // pred_check_branch
          %665 = sbr.rel (%p663) target = $region108
        $region107: #{_lambda_.1} parent=87 // pred_region
          %667 = dma.done [#allocation10], 256
        $region108: #{_lambda_.1} parent=87 // pred_fallthru
          _
        // Predicated region
        $region109: #{_lambda_.1} parent=87 // pred_check
          %p668 = pneg %p253
        $region110: #{_lambda_.1} parent=87 // pred_check_branch
          %670 = sbr.rel (%p668) target = $region112
        $region111: #{_lambda_.1} parent=87 // pred_region
          %672 = dma.done [#allocation13], 16
        $region112: #{_lambda_.1} parent=87 // pred_fallthru
          _
        // Predicated region
        $region113: #{_lambda_.1} parent=87 // pred_check
          %p673 = pneg %p274
        $region114: #{_lambda_.1} parent=87 // pred_check_branch
          %675 = sbr.rel (%p673) target = $region116
        $region115: #{_lambda_.1} parent=87 // pred_region
          %677 = dma.done [#allocation13], 256
        $region116: #{_lambda_.1} parent=87 // pred_fallthru
          _
        // Predicated region
        $region117: #{_lambda_.1} parent=87 // pred_check
          %p678 = pneg %p295
        $region118: #{_lambda_.1} parent=87 // pred_check_branch
          %680 = sbr.rel (%p678) target = $region120
        $region119: #{_lambda_.1} parent=87 // pred_region
          %682 = dma.done [#allocation16], 16
        $region120: #{_lambda_.1} parent=87 // pred_fallthru
          _
        // Predicated region
        $region121: #{_lambda_.1} parent=87 // pred_check
          %p683 = pneg %p400
        $region122: #{_lambda_.1} parent=87 // pred_check_branch
          %685 = sbr.rel (%p683) target = $region124
        $region123: #{_lambda_.1} parent=87 // pred_region
          %687 = dma.done [#allocation16], 512
        $region124: #{_lambda_.1} parent=87 // pred_fallthru
          _
        %s688 = sand.u32 %s62, 1
        %s689 = scalar_lea.sflag [#allocation4], %s688
        %s690 = sand.u32 %s62, 1
        %s691 = smul.addr %s690, 8
        %s692 = scalar_lea.vmem [#allocation3], %s691
        %p693 = pneg %p75
        %p694 = pneg %p72
        %s695 = sand.u32 %s40, 1
        %s696 = scalar_lea.sflag [#allocation7], %s695
        %s697 = sand.u32 %s88, 1
        %s698 = smul.addr %s697, 8
        %s699 = scalar_lea.vmem [#allocation6], %s698
        %p700 = pneg %p101
        %p701 = pneg %p98
        %p702 = scmp.lt.s32.totalorder %s44, 1
        %s703 = scalar_select %p702, %s44, 1
        %s704 = scalar_lea.vmem %s2, %s703
        %p705 = pneg %p127
        %p706 = pneg %p124
        %p707 = pneg %p148
        %p708 = pneg %p145
        %p709 = pneg %p169
        %p710 = pneg %p166
        %p711 = pneg %p190
        %p712 = pneg %p187
        %p713 = pneg %p211
        %p714 = pneg %p208
        %p715 = pneg %p232
        %p716 = pneg %p229
        %p717 = pneg %p253
        %p718 = pneg %p250
        %p719 = pneg %p274
        %p720 = pneg %p271
        %p721 = pneg %p295
        %p722 = pneg %p292
        %p723 = pneg %p316
        %p724 = pneg %p313
        %p725 = pneg %p337
        %p726 = pneg %p334
        %p727 = pneg %p358
        %p728 = pneg %p355
        %p729 = pneg %p379
        %p730 = pneg %p376
        %p731 = pneg %p400
        %p732 = pneg %p397
        %p733 = pneg %p421
        %p734 = pneg %p418
        %p735 = pneg %p449
        %p736 = pneg %p446
        %s737 = sand.u32 %s436, 1
        %s738 = scalar_lea.sflag [#allocation5], %s737
        %s739 = sand.u32 %s436, 1
        %s740 = smul.addr %s739, 8
        %s741 = scalar_lea.vmem [#allocation18], %s740
        %p742 = scmp.lt.s32.totalorder %s44, 1
        %s743 = scalar_select %p742, %s44, 1
        %s744 = scalar_lea.vmem %s2, %s743
        %p746 = scmp.eq.s32.totalorder %s45, 0
        // Predicated region
        $region125: #{_lambda_.1} parent=87 // pred_check
          %p747 = pneg %p746
        $region126: #{_lambda_.1} parent=87 // pred_check_branch
          %749 = sbr.rel (%p747) target = $region128
        $region127: #{_lambda_.1} parent=87 // pred_region
          %v750 = vld [vmem:[%s647] sm:$0xff]
          %vm751 = vcmask 261120
          %v752 = vsel %vm751, %v750, 0.0
          %753 = vadd.xlane.f32.xlu0 %v752
          %v754 = vpop.xlane.xlu0 %753
          %v755 = vrcp.pop 32.0
          %v756 = vmul.f32 32.0, %v755
          %v757 = vsub.f32 1.0, %v756
          %v758 = vmul.f32 %v755, %v757
          %v759 = vadd.f32 %v755, %v758
          %vm760 = vweird.f32 %v755
          %v761 = vsel %vm760, %v755, %v759
          %v762 = vmul.f32 %v754, %v761
          %v763 = vsub.f32 %v750, %v762
          %v764 = vmul.f32 %v763, %v763
          %v765 = vsel %vm751, %v764, 0.0
          %766 = vadd.xlane.f32.xlu0 %v765
          %v767 = vpop.xlane.xlu0 %766
          %v768 = vmul.f32 %v767, %v761
          %v769 = vadd.f32 %v768, 1e-05
          %v770 = vrsqrt.pop %v769
          %v771 = vmul.f32 %v770, %v769
          %v772 = vmul.f32 %v771, %v770
          %v773 = vmul.f32 0.5, %v772
          %v774 = vsub.f32 1.5, %v773
          %v775 = vmul.f32 %v770, %v774
          %vm776 = vweird.f32 %v769
          %vm777 = vweird.f32 %v770
          %vm778 = vmor %vm776, %vm777
          %v779 = vsel %vm778, %v770, %v775
          %v780 = vmul.f32 %v763, %v779
          %v781 = vld [vmem:[%s3] sm:$0x1]
          %v783 = vperm.slane %v781, 0
          %v785 = vmul.f32 %v780, %v783
          %v786 = vld [vmem:[%s4] sm:$0x1]
          %v788 = vperm.slane %v786, 0
          %v790 = vadd.f32 %v785, %v788
          %v791 = vpack.c.bf16 %v790, %v790
          %v792 = vld [vmem:[#allocation11] sm:$0xf]
          %v793 = vld [vmem:[#allocation11 + $0x4] sm:$0xf]
          %v794 = vld [vmem:[#allocation11 + $0x8] sm:$0xf]
          %v795 = vld [vmem:[#allocation11 + $0xc] sm:$0xf]
          %v796 = vld [vmem:[#allocation12] sm:$0x1]
          %v798 = vperm.slane %v796, 0
          %v804 = vunpack.c.l.b16 %v792
          %v805 = vunpack.c.l.b16 %v793
          %v806 = vunpack.c.l.b16 %v794
          %v807 = vunpack.c.l.b16 %v795
          %v808 = vpack.c.b16 %v805, %v804
          %v809 = vpack.c.b16 %v807, %v806
          %v813 = vsel %vm751, %v791, 0
          %815 = vmatpush.bf16.msra.mxu0 0
          %816 = vmatpush.bf16.msra.mxu0 0
          %817 = vmatpush.bf16.msra.mxu0 0
          %818 = vmatpush.bf16.msra.mxu0 0
          %819 = vmatpush.bf16.msra.mxu0 0
          %820 = vmatpush.bf16.msra.mxu0 0
          %821 = vmatpush.bf16.msra.mxu0 %v809
          %822 = vmatpush.bf16.msra.mxu0 %v808
          %823 = vmatmul.bf16.gmra.mxu0 %v813
          %v824 = vpop.f32.mrf.mxu0
          %v825 = vadd.f32 %v798, %v824
          %v826 = vpop.f32.mrf.mxu0
          %827 = vdwg.mxu0
          %v828 = vpack.c.bf16 %v825, %v825
          %vm829 = vcmask 519168
          %830 = vst.msk [vmem:[#allocation2] sm:$0xf] %vm829, %v828
        $region128: #{_lambda_.1} parent=87 // pred_fallthru
          _
        %v831 = vld [vmem:[%s637] sm:$0xff]
        %vm832 = vcmask 261120
        %v833 = vsel %vm832, %v831, 0.0
        %834 = vadd.xlane.f32.xlu0 %v833
        %v835 = vpop.xlane.xlu0 %834
        %v836 = vrcp.pop 32.0
        %v837 = vmul.f32 32.0, %v836
        %v838 = vsub.f32 1.0, %v837
        %v839 = vmul.f32 %v836, %v838
        %v840 = vadd.f32 %v836, %v839
        %vm841 = vweird.f32 %v836
        %v842 = vsel %vm841, %v836, %v840
        %v843 = vmul.f32 %v835, %v842
        %v844 = vsub.f32 %v831, %v843
        %v845 = vmul.f32 %v844, %v844
        %v846 = vsel %vm832, %v845, 0.0
        %847 = vadd.xlane.f32.xlu0 %v846
        %v848 = vpop.xlane.xlu0 %847
        %v849 = vmul.f32 %v848, %v842
        %v850 = vadd.f32 %v849, 1e-05
        %v851 = vrsqrt.pop %v850
        %v852 = vmul.f32 %v851, %v850
        %v853 = vmul.f32 %v852, %v851
        %v854 = vmul.f32 0.5, %v853
        %v855 = vsub.f32 1.5, %v854
        %v856 = vmul.f32 %v851, %v855
        %vm857 = vweird.f32 %v850
        %vm858 = vweird.f32 %v851
        %vm859 = vmor %vm857, %vm858
        %v860 = vsel %vm859, %v851, %v856
        %v861 = vmul.f32 %v844, %v860
        %v862 = vld [vmem:[%s3] sm:$0x1]
        %v864 = vperm.slane %v862, 0
        %v866 = vmul.f32 %v861, %v864
        %v867 = vld [vmem:[%s4] sm:$0x1]
        %v869 = vperm.slane %v867, 0
        %v871 = vadd.f32 %v866, %v869
        %v872 = vpack.c.bf16 %v871, %v871
        %v873 = vld [vmem:[#allocation8] sm:$0xf]
        %v874 = vld [vmem:[#allocation8 + $0x4] sm:$0xf]
        %v875 = vld [vmem:[#allocation8 + $0x8] sm:$0xf]
        %v876 = vld [vmem:[#allocation8 + $0xc] sm:$0xf]
        %v877 = vld [vmem:[#allocation9] sm:$0x1]
        %v879 = vperm.slane %v877, 0
        %v885 = vunpack.c.l.b16 %v873
        %v886 = vunpack.c.l.b16 %v874
        %v887 = vunpack.c.l.b16 %v875
        %v888 = vunpack.c.l.b16 %v876
        %v889 = vpack.c.b16 %v886, %v885
        %v890 = vpack.c.b16 %v888, %v887
        %v894 = vsel %vm832, %v872, 0
        %896 = vmatpush.bf16.msra.mxu0 0
        %897 = vmatpush.bf16.msra.mxu0 0
        %898 = vmatpush.bf16.msra.mxu0 0
        %899 = vmatpush.bf16.msra.mxu0 0
        %900 = vmatpush.bf16.msra.mxu0 0
        %901 = vmatpush.bf16.msra.mxu0 0
        %902 = vmatpush.bf16.msra.mxu0 %v890
        %903 = vmatpush.bf16.msra.mxu0 %v889
        %904 = vmatmul.bf16.gmra.mxu0 %v894
        %v905 = vpop.f32.mrf.mxu0
        %v906 = vadd.f32 %v879, %v905
        %v907 = vpop.f32.mrf.mxu0
        %908 = vdwg.mxu0
        %v909 = vld [vmem:[%s744] sm:$0x1]
        %vm910 = vcmp.gt.f32.partialorder %v909, 0.5
        %v911 = vpack.c.bf16 %v906, %v906
        %v912 = vld [vmem:[#allocation2] sm:$0xf]
        %vm913 = vcmask 64512
        %v915 = vsel %vm913, %v911, 0
        %v918 = vsel %vm913, %v912, 0
        %920 = vmatpush.bf16.xpose.msra.mxu0 0
        %921 = vmatpush.bf16.xpose.msra.mxu0 0
        %922 = vmatpush.bf16.xpose.msra.mxu0 0
        %923 = vmatpush.bf16.xpose.msra.mxu0 0
        %924 = vmatpush.bf16.xpose.msra.mxu0 0
        %925 = vmatpush.bf16.xpose.msra.mxu0 0
        %926 = vmatpush.bf16.xpose.msra.mxu0 0
        %927 = vmatpush.bf16.xpose.msra.mxu0 %v918
        %928 = vmatmul.bf16.gmra.mxu0 %v915
        %v929 = vpop.f32.mrf.mxu0
        %v930 = vadd.f32 0.0, %v929
        %v931 = vpop.f32.mrf.mxu0
        %932 = vdwg.mxu0
        %v933 = vsel %vm910, 1, 0
        %v934 = vperm.slane %v933, 0
        %vm935 = vcmp.eq.s32.totalorder %v934, 1
        %v936 = vsel %vm935, -1e+09, %v930
        %v937 = vsel %vm913, %v936, -inf
        %938 = vmax.xlane.f32.xlu0 %v937
        %v939 = vpop.xlane.xlu0 %938
        %v940 = vsub.f32 %v936, %v939
        %v941 = vmul.f32 %v940, 1.442695
        %v942 = vpow.pop %v941
        %v943 = vsel %vm913, %v942, 0.0
        %944 = vadd.xlane.f32.xlu0 %v943
        %v945 = vpop.xlane.xlu0 %944
        %v946 = vrcp.pop %v945
        %v947 = vmul.f32 %v942, %v946
        %v948 = vpack.c.bf16 %v947, %v947
        %v950 = vunpack.c.l.b16 %v912
        %v951 = vpack.c.b16 %v950, %v950
        %952 = vrot.lane.b32.xlu0 %v951, 96
        %v953 = vpop.permute.xlu0 %952
        %v955 = vsel %vm913, %v948, 0
        %vm957 = vcmask 1043456
        %v959 = vsel %vm957, %v953, 0
        %961 = vmatpush.bf16.msra.mxu0 0
        %962 = vmatpush.bf16.msra.mxu0 0
        %963 = vmatpush.bf16.msra.mxu0 0
        %964 = vmatpush.bf16.msra.mxu0 0
        %965 = vmatpush.bf16.msra.mxu0 0
        %966 = vmatpush.bf16.msra.mxu0 0
        %967 = vmatpush.bf16.msra.mxu0 0
        %968 = vmatpush.bf16.msra.mxu0 %v959
        %969 = vmatmul.bf16.gmra.mxu0 %v955
        %v970 = vpop.f32.mrf.mxu0
        %v971 = vadd.f32 0.0, %v970
        %v972 = vpop.f32.mrf.mxu0
        %973 = vdwg.mxu0
        %v974 = vpack.c.bf16 %v971, %v971
        %v975 = vld [vmem:[#allocation14] sm:$0xf]
        %977 = vrot.lane.b32.xlu0 %v911, 120
        %v978 = vpop.permute.xlu0 %977
        %979 = vrot.lane.b32.xlu0 %v951, 120
        %v980 = vpop.permute.xlu0 %979
        %v982 = vsel %vm913, %v978, 0
        %v985 = vsel %vm913, %v980, 0
        %987 = vmatpush.bf16.xpose.msra.mxu0 0
        %988 = vmatpush.bf16.xpose.msra.mxu0 0
        %989 = vmatpush.bf16.xpose.msra.mxu0 0
        %990 = vmatpush.bf16.xpose.msra.mxu0 0
        %991 = vmatpush.bf16.xpose.msra.mxu0 0
        %992 = vmatpush.bf16.xpose.msra.mxu0 0
        %993 = vmatpush.bf16.xpose.msra.mxu0 0
        %994 = vmatpush.bf16.xpose.msra.mxu0 %v985
        %995 = vmatmul.bf16.gmra.mxu0 %v982
        %v996 = vpop.f32.mrf.mxu0
        %v997 = vadd.f32 0.0, %v996
        %v998 = vpop.f32.mrf.mxu0
        %999 = vdwg.mxu0
        %v1000 = vsel %vm935, -1e+09, %v997
        %v1001 = vsel %vm913, %v1000, -inf
        %1002 = vmax.xlane.f32.xlu0 %v1001
        %v1003 = vpop.xlane.xlu0 %1002
        %v1004 = vsub.f32 %v1000, %v1003
        %v1005 = vmul.f32 %v1004, 1.442695
        %v1006 = vpow.pop %v1005
        %v1007 = vsel %vm913, %v1006, 0.0
        %1008 = vadd.xlane.f32.xlu0 %v1007
        %v1009 = vpop.xlane.xlu0 %1008
        %v1010 = vrcp.pop %v1009
        %v1011 = vmul.f32 %v1006, %v1010
        %v1012 = vpack.c.bf16 %v1011, %v1011
        %1013 = vrot.lane.b32.xlu0 %v951, 88
        %v1014 = vpop.permute.xlu0 %1013
        %v1016 = vsel %vm913, %v1012, 0
        %v1019 = vsel %vm957, %v1014, 0
        %1021 = vmatpush.bf16.msra.mxu0 0
        %1022 = vmatpush.bf16.msra.mxu0 0
        %1023 = vmatpush.bf16.msra.mxu0 0
        %1024 = vmatpush.bf16.msra.mxu0 0
        %1025 = vmatpush.bf16.msra.mxu0 0
        %1026 = vmatpush.bf16.msra.mxu0 0
        %1027 = vmatpush.bf16.msra.mxu0 0
        %1028 = vmatpush.bf16.msra.mxu0 %v1019
        %1029 = vmatmul.bf16.gmra.mxu0 %v1016
        %v1030 = vpop.f32.mrf.mxu0
        %v1031 = vadd.f32 0.0, %v1030
        %v1032 = vpop.f32.mrf.mxu0
        %1033 = vdwg.mxu0
        %v1034 = vpack.c.bf16 %v1031, %v1031
        %v1035 = vld [vmem:[#allocation14 + $0x4] sm:$0xf]
        %v1037 = vsel %vm913, %v1034, 0
        %v1040 = vsel %vm957, %v1035, 0
        %1042 = vmatpush.bf16.msra.mxu0 0
        %1043 = vmatpush.bf16.msra.mxu0 0
        %1044 = vmatpush.bf16.msra.mxu0 0
        %1045 = vmatpush.bf16.msra.mxu0 0
        %1046 = vmatpush.bf16.msra.mxu0 0
        %1047 = vmatpush.bf16.msra.mxu0 0
        %1048 = vmatpush.bf16.msra.mxu0 0
        %1049 = vmatpush.bf16.msra.mxu0 %v1040
        %1050 = vmatmul.bf16.gmra.mxu0 %v1037
        %v1051 = vpop.f32.mrf.mxu0
        %v1052 = vadd.f32 0.0, %v1051
        %v1053 = vpop.f32.mrf.mxu0
        %1054 = vdwg.mxu0
        %v1056 = vsel %vm913, %v974, 0
        %v1059 = vsel %vm957, %v975, 0
        %1061 = vmatpush.bf16.msra.mxu0 0
        %1062 = vmatpush.bf16.msra.mxu0 0
        %1063 = vmatpush.bf16.msra.mxu0 0
        %1064 = vmatpush.bf16.msra.mxu0 0
        %1065 = vmatpush.bf16.msra.mxu0 0
        %1066 = vmatpush.bf16.msra.mxu0 0
        %1067 = vmatpush.bf16.msra.mxu0 0
        %1068 = vmatpush.bf16.msra.mxu0 %v1059
        %1069 = vmatmul.bf16.gmra.mxu0 %v1056
        %v1070 = vpop.f32.mrf.mxu0
        %v1071 = vadd.f32 %v1052, %v1070
        %v1072 = vpop.f32.mrf.mxu0
        %1073 = vdwg.mxu0
        %1074 = vrot.lane.b32.xlu0 %v911, 112
        %v1075 = vpop.permute.xlu0 %1074
        %1076 = vrot.lane.b32.xlu0 %v951, 112
        %v1077 = vpop.permute.xlu0 %1076
        %v1079 = vsel %vm913, %v1075, 0
        %v1082 = vsel %vm913, %v1077, 0
        %1084 = vmatpush.bf16.xpose.msra.mxu0 0
        %1085 = vmatpush.bf16.xpose.msra.mxu0 0
        %1086 = vmatpush.bf16.xpose.msra.mxu0 0
        %1087 = vmatpush.bf16.xpose.msra.mxu0 0
        %1088 = vmatpush.bf16.xpose.msra.mxu0 0
        %1089 = vmatpush.bf16.xpose.msra.mxu0 0
        %1090 = vmatpush.bf16.xpose.msra.mxu0 0
        %1091 = vmatpush.bf16.xpose.msra.mxu0 %v1082
        %1092 = vmatmul.bf16.gmra.mxu0 %v1079
        %v1093 = vpop.f32.mrf.mxu0
        %v1094 = vadd.f32 0.0, %v1093
        %v1095 = vpop.f32.mrf.mxu0
        %1096 = vdwg.mxu0
        %v1097 = vsel %vm935, -1e+09, %v1094
        %v1098 = vsel %vm913, %v1097, -inf
        %1099 = vmax.xlane.f32.xlu0 %v1098
        %v1100 = vpop.xlane.xlu0 %1099
        %v1101 = vsub.f32 %v1097, %v1100
        %v1102 = vmul.f32 %v1101, 1.442695
        %v1103 = vpow.pop %v1102
        %v1104 = vsel %vm913, %v1103, 0.0
        %1105 = vadd.xlane.f32.xlu0 %v1104
        %v1106 = vpop.xlane.xlu0 %1105
        %v1107 = vrcp.pop %v1106
        %v1108 = vmul.f32 %v1103, %v1107
        %v1109 = vpack.c.bf16 %v1108, %v1108
        %1110 = vrot.lane.b32.xlu0 %v951, 80
        %v1111 = vpop.permute.xlu0 %1110
        %v1113 = vsel %vm913, %v1109, 0
        %v1116 = vsel %vm957, %v1111, 0
        %1118 = vmatpush.bf16.msra.mxu0 0
        %1119 = vmatpush.bf16.msra.mxu0 0
        %1120 = vmatpush.bf16.msra.mxu0 0
        %1121 = vmatpush.bf16.msra.mxu0 0
        %1122 = vmatpush.bf16.msra.mxu0 0
        %1123 = vmatpush.bf16.msra.mxu0 0
        %1124 = vmatpush.bf16.msra.mxu0 0
        %1125 = vmatpush.bf16.msra.mxu0 %v1116
        %1126 = vmatmul.bf16.gmra.mxu0 %v1113
        %v1127 = vpop.f32.mrf.mxu0
        %v1128 = vadd.f32 0.0, %v1127
        %v1129 = vpop.f32.mrf.mxu0
        %1130 = vdwg.mxu0
        %v1131 = vpack.c.bf16 %v1128, %v1128
        %v1132 = vld [vmem:[#allocation14 + $0x8] sm:$0xf]
        %v1134 = vsel %vm913, %v1131, 0
        %v1137 = vsel %vm957, %v1132, 0
        %1139 = vmatpush.bf16.msra.mxu0 0
        %1140 = vmatpush.bf16.msra.mxu0 0
        %1141 = vmatpush.bf16.msra.mxu0 0
        %1142 = vmatpush.bf16.msra.mxu0 0
        %1143 = vmatpush.bf16.msra.mxu0 0
        %1144 = vmatpush.bf16.msra.mxu0 0
        %1145 = vmatpush.bf16.msra.mxu0 0
        %1146 = vmatpush.bf16.msra.mxu0 %v1137
        %1147 = vmatmul.bf16.gmra.mxu0 %v1134
        %v1148 = vpop.f32.mrf.mxu0
        %v1149 = vadd.f32 0.0, %v1148
        %v1150 = vpop.f32.mrf.mxu0
        %1151 = vdwg.mxu0
        %v1152 = vadd.f32 %v1071, %v1149
        %1153 = vrot.lane.b32.xlu0 %v911, 104
        %v1154 = vpop.permute.xlu0 %1153
        %1155 = vrot.lane.b32.xlu0 %v951, 104
        %v1156 = vpop.permute.xlu0 %1155
        %v1158 = vsel %vm913, %v1154, 0
        %v1161 = vsel %vm913, %v1156, 0
        %1163 = vmatpush.bf16.xpose.msra.mxu0 0
        %1164 = vmatpush.bf16.xpose.msra.mxu0 0
        %1165 = vmatpush.bf16.xpose.msra.mxu0 0
        %1166 = vmatpush.bf16.xpose.msra.mxu0 0
        %1167 = vmatpush.bf16.xpose.msra.mxu0 0
        %1168 = vmatpush.bf16.xpose.msra.mxu0 0
        %1169 = vmatpush.bf16.xpose.msra.mxu0 0
        %1170 = vmatpush.bf16.xpose.msra.mxu0 %v1161
        %1171 = vmatmul.bf16.gmra.mxu0 %v1158
        %v1172 = vpop.f32.mrf.mxu0
        %v1173 = vadd.f32 0.0, %v1172
        %v1174 = vpop.f32.mrf.mxu0
        %1175 = vdwg.mxu0
        %v1176 = vsel %vm935, -1e+09, %v1173
        %v1177 = vsel %vm913, %v1176, -inf
        %1178 = vmax.xlane.f32.xlu0 %v1177
        %v1179 = vpop.xlane.xlu0 %1178
        %v1180 = vsub.f32 %v1176, %v1179
        %v1181 = vmul.f32 %v1180, 1.442695
        %v1182 = vpow.pop %v1181
        %v1183 = vsel %vm913, %v1182, 0.0
        %1184 = vadd.xlane.f32.xlu0 %v1183
        %v1185 = vpop.xlane.xlu0 %1184
        %v1186 = vrcp.pop %v1185
        %v1187 = vmul.f32 %v1182, %v1186
        %v1188 = vpack.c.bf16 %v1187, %v1187
        %1189 = vrot.lane.b32.xlu0 %v951, 72
        %v1190 = vpop.permute.xlu0 %1189
        %v1192 = vsel %vm913, %v1188, 0
        %v1195 = vsel %vm957, %v1190, 0
        %1197 = vmatpush.bf16.msra.mxu0 0
        %1198 = vmatpush.bf16.msra.mxu0 0
        %1199 = vmatpush.bf16.msra.mxu0 0
        %1200 = vmatpush.bf16.msra.mxu0 0
        %1201 = vmatpush.bf16.msra.mxu0 0
        %1202 = vmatpush.bf16.msra.mxu0 0
        %1203 = vmatpush.bf16.msra.mxu0 0
        %1204 = vmatpush.bf16.msra.mxu0 %v1195
        %1205 = vmatmul.bf16.gmra.mxu0 %v1192
        %v1206 = vpop.f32.mrf.mxu0
        %v1207 = vadd.f32 0.0, %v1206
        %v1208 = vpop.f32.mrf.mxu0
        %1209 = vdwg.mxu0
        %v1210 = vpack.c.bf16 %v1207, %v1207
        %v1211 = vld [vmem:[#allocation14 + $0xc] sm:$0xf]
        %v1213 = vsel %vm913, %v1210, 0
        %v1216 = vsel %vm957, %v1211, 0
        %1218 = vmatpush.bf16.msra.mxu0 0
        %1219 = vmatpush.bf16.msra.mxu0 0
        %1220 = vmatpush.bf16.msra.mxu0 0
        %1221 = vmatpush.bf16.msra.mxu0 0
        %1222 = vmatpush.bf16.msra.mxu0 0
        %1223 = vmatpush.bf16.msra.mxu0 0
        %1224 = vmatpush.bf16.msra.mxu0 0
        %1225 = vmatpush.bf16.msra.mxu0 %v1216
        %1226 = vmatmul.bf16.gmra.mxu0 %v1213
        %v1227 = vpop.f32.mrf.mxu0
        %v1228 = vadd.f32 0.0, %v1227
        %v1229 = vpop.f32.mrf.mxu0
        %1230 = vdwg.mxu0
        %v1231 = vadd.f32 %v1152, %v1228
        %v1232 = vadd.f32 %v831, %v1231
        %v1233 = vld [vmem:[#allocation15] sm:$0x1]
        %v1235 = vperm.slane %v1233, 0
        %v1237 = vadd.f32 %v1232, %v1235
        %v1238 = vsel %vm832, %v1237, 0.0
        %1239 = vadd.xlane.f32.xlu0 %v1238
        %v1240 = vpop.xlane.xlu0 %1239
        %v1241 = vmul.f32 %v1240, %v842
        %v1242 = vsub.f32 %v1237, %v1241
        %v1243 = vmul.f32 %v1242, %v1242
        %v1244 = vsel %vm832, %v1243, 0.0
        %1245 = vadd.xlane.f32.xlu0 %v1244
        %v1246 = vpop.xlane.xlu0 %1245
        %v1247 = vmul.f32 %v1246, %v842
        %v1248 = vadd.f32 %v1247, 1e-05
        %v1249 = vrsqrt.pop %v1248
        %v1250 = vmul.f32 %v1249, %v1248
        %v1251 = vmul.f32 %v1250, %v1249
        %v1252 = vmul.f32 0.5, %v1251
        %v1253 = vsub.f32 1.5, %v1252
        %v1254 = vmul.f32 %v1249, %v1253
        %vm1255 = vweird.f32 %v1248
        %vm1256 = vweird.f32 %v1249
        %vm1257 = vmor %vm1255, %vm1256
        %v1258 = vsel %vm1257, %v1249, %v1254
        %v1259 = vmul.f32 %v1242, %v1258
        %v1260 = vld [vmem:[%s11] sm:$0x1]
        %v1262 = vperm.slane %v1260, 0
        %v1264 = vmul.f32 %v1259, %v1262
        %v1265 = vld [vmem:[%s12] sm:$0x1]
        %v1267 = vperm.slane %v1265, 0
        %v1269 = vadd.f32 %v1264, %v1267
        %v1270 = vpack.c.bf16 %v1269, %v1269
        %v1271 = vld [vmem:[%s13] sm:$0xf]
        %v1272 = vld [vmem:[%s13 + $0x4] sm:$0xf]
        %v1273 = vld [vmem:[%s13 + $0x8] sm:$0xf]
        %v1274 = vld [vmem:[%s13 + $0xc] sm:$0xf]
        %v1275 = vld [vmem:[%s14] sm:$0x1]
        %v1277 = vperm.slane %v1275, 0
        %v1283 = vunpack.c.l.b16 %v1271
        %v1284 = vunpack.c.l.b16 %v1272
        %v1285 = vunpack.c.l.b16 %v1273
        %v1286 = vunpack.c.l.b16 %v1274
        %v1287 = vpack.c.b16 %v1284, %v1283
        %v1288 = vpack.c.b16 %v1286, %v1285
        %v1292 = vsel %vm832, %v1270, 0
        %1294 = vmatpush.bf16.msra.mxu0 0
        %1295 = vmatpush.bf16.msra.mxu0 0
        %1296 = vmatpush.bf16.msra.mxu0 0
        %1297 = vmatpush.bf16.msra.mxu0 0
        %1298 = vmatpush.bf16.msra.mxu0 0
        %1299 = vmatpush.bf16.msra.mxu0 0
        %1300 = vmatpush.bf16.msra.mxu0 %v1288
        %1301 = vmatpush.bf16.msra.mxu0 %v1287
        %1302 = vmatmul.bf16.gmra.mxu0 %v1292
        %v1303 = vpop.f32.mrf.mxu0
        %v1304 = vadd.f32 %v1277, %v1303
        %v1305 = vpop.f32.mrf.mxu0
        %1306 = vdwg.mxu0
        %v1307 = vmax.f32 %v1304, 0.0
        %v1308 = vpack.c.bf16 %v1307, %v1307
        %v1309 = vld [vmem:[#allocation17] sm:$0xf]
        %v1310 = vld [vmem:[#allocation17 + $0x4] sm:$0xf]
        %v1311 = vld [vmem:[#allocation17 + $0x8] sm:$0xf]
        %v1312 = vld [vmem:[#allocation17 + $0xc] sm:$0xf]
        %v1313 = vld [vmem:[#allocation17 + $0x10] sm:$0xf]
        %v1314 = vld [vmem:[#allocation17 + $0x14] sm:$0xf]
        %v1315 = vld [vmem:[#allocation17 + $0x18] sm:$0xf]
        %v1316 = vld [vmem:[#allocation17 + $0x1c] sm:$0xf]
        %v1325 = vunpack.c.l.b16 %v1309
        %v1326 = vunpack.c.l.b16 %v1310
        %v1327 = vunpack.c.l.b16 %v1311
        %v1328 = vunpack.c.l.b16 %v1312
        %v1329 = vunpack.c.l.b16 %v1313
        %v1330 = vunpack.c.l.b16 %v1314
        %v1331 = vunpack.c.l.b16 %v1315
        %v1332 = vunpack.c.l.b16 %v1316
        %v1333 = vpack.c.b16 %v1326, %v1325
        %v1334 = vpack.c.b16 %v1328, %v1327
        %v1335 = vpack.c.b16 %v1330, %v1329
        %v1336 = vpack.c.b16 %v1332, %v1331
        %vm1341 = vcmask 523264
        %v1343 = vsel %vm1341, %v1308, 0
        %1345 = vmatpush.bf16.msra.mxu0 0
        %1346 = vmatpush.bf16.msra.mxu0 0
        %1347 = vmatpush.bf16.msra.mxu0 0
        %1348 = vmatpush.bf16.msra.mxu0 0
        %1349 = vmatpush.bf16.msra.mxu0 %v1336
        %1350 = vmatpush.bf16.msra.mxu0 %v1335
        %1351 = vmatpush.bf16.msra.mxu0 %v1334
        %1352 = vmatpush.bf16.msra.mxu0 %v1333
        %1353 = vmatmul.bf16.gmra.mxu0 %v1343
        %v1354 = vpop.f32.mrf.mxu0
        %v1355 = vadd.f32 0.0, %v1354
        %v1356 = vpop.f32.mrf.mxu0
        %1357 = vdwg.mxu0
        %v1358 = vadd.f32 %v1237, %v1355
        %v1359 = vld [vmem:[%s16] sm:$0x1]
        %v1361 = vperm.slane %v1359, 0
        %v1363 = vadd.f32 %v1358, %v1361
        %1364 = vst.msk [vmem:[%s741] sm:$0xff] %vm832, %v1363
        %s1365 = sand.u32 %s436, 1
        %s1366 = scalar_lea.sflag [#allocation5], %s1365
        %s1367 = sand.u32 %s436, 1
        %s1368 = smul.addr %s1367, 8
        %s1369 = scalar_lea.vmem [#allocation18], %s1368
        // Predicated region
        $region129: #{_lambda_.1} parent=87 // pred_check
          %p1370 = pneg %p446
        $region130: #{_lambda_.1} parent=87 // pred_check_branch
          %1372 = sbr.rel (%p1370) target = $region132
        $region131: #{_lambda_.1} parent=87 // pred_region
          %1374 = vsyncadd %s1366, 0
          %s1375 = sadd.s32 %s45, %s44
          %s1376 = smul.addr %s1375, 8
          %s1377 = scalar_lea.hbm %s17, %s1376
          %s1379 = sshll.u32 %s1369, 4
          %s1380 = int_to_ptr.vmem [resolvable:$true] %s1379
          %s1381 = sshll.u32 %s1377, 4
          %s1382 = int_to_ptr.hbm [resolvable:$true] %s1381
          %1384 = dma.vmem_to_hbm [thread:$0]  %s1380, 128, %s1382, %s1366
        $region132: #{_lambda_.1} parent=87 // pred_fallthru
          _
      $region88: #{_lambda_.1} parent=5 // pred_fallthru
        _
      %p1385 = scmp.le.s32.totalorder 2, %s35
      // Predicated region
      $region133: #{_lambda_.1} parent=5 // pred_check
        %p1386 = pneg %p1385
      $region134: #{_lambda_.1} parent=5 // pred_check_branch
        %1388 = sbr.rel (%p1386) target = $region136
      $region135: #{_lambda_.1} parent=5 // pred_region
        %s1389 = ssub.s32 %s35, 2
        // Predicated region
        $region137: #{_lambda_.1} parent=135 // pred_check
          %p1390 = pneg %p452
        $region138: #{_lambda_.1} parent=135 // pred_check_branch
          %1392 = sbr.rel (%p1390) target = $region140
        $region139: #{_lambda_.1} parent=135 // pred_region
          %s1393 = sand.u32 %s437, 1
          %s1394 = scalar_lea.sflag [#allocation5], %s1393
          %s1395 = sand.u32 %s437, 1
          %s1396 = smul.addr %s1395, 8
          %s1397 = scalar_lea.vmem [#allocation18], %s1396
          %1399 = dma.done %s1394, 128
        $region140: #{_lambda_.1} parent=135 // pred_fallthru
          _
      $region136: #{_lambda_.1} parent=5 // pred_fallthru
        _
    $region6: #{_lambda_.1} parent=1 // loop_footer
      %s39 = sadd.s32 1, %s35
    $region7: #{_lambda_.1} parent=1 // loop_footer_branch
      %34 = sbr.rel target = $region3
    $region8: #{_lambda_.1} parent=1 // loop_exit
      _
    %1400 = vsyncpa [#allocation4], 1
    %s1401 = scalar_lea.sflag [#allocation4], 1
    %1402 = vsyncpa %s1401, 1
    %1403 = vsyncpa [#allocation7], 1
    %s1404 = scalar_lea.sflag [#allocation7], 1
    %1405 = vsyncpa %s1404, 1
    %1406 = vsyncpa [#allocation10], 1
    %1407 = vsyncpa [#allocation13], 1
    %1408 = vsyncpa [#allocation16], 1
    %1409 = vsyncpa [#allocation5], 1
    %s1410 = scalar_lea.sflag [#allocation5], 1
    %1411 = vsyncpa %s1410, 1

</llo_original>
